<compile_context>
chip_gen: v6e
topology: v6e:2x2x1
jax: 0.10.0
libtpu: 0.0.40
codegen_flags: <defaults>
</compile_context>

<pallas_src>
import functools

import jax
import jax.numpy as jnp
from jax import lax
from jax.experimental import pallas as pl
from jax.experimental.pallas import tpu as pltpu


# ----------------------------------------------------------------------------
# Small static helpers (all run at trace/prepare time, never per-element).
# ----------------------------------------------------------------------------
def _round_up(x, m):
    return ((x + m - 1) // m) * m


def _cdiv(a, b):
    return -(-a // b)


def _device_kind():
    try:
        return jax.devices()[0].device_kind.lower()
    except Exception:
        return ""


def _default_bm(kind):
    """Per-generation batch-tile default (roofline crossover for fc1)."""
    if "v6" in kind:
        return 2048   # 128 MiB VMEM, needs large bm to leave the BW-bound regime
    if "v7" in kind:
        return 1024   # 64 MiB VMEM; ~30 MiB footprint at bm=1024, bk=2048
    return 512        # v5e (and fallback): compute-bound already at bm~512


def _default_vmem_limit(kind):
    if "v6" in kind:
        return 100 * 1024 * 1024
    if "v7" in kind:
        return 56 * 1024 * 1024     # leave compiler headroom on the 64 MiB part
    return 64 * 1024 * 1024


def _choose_k_tiling(feat, bk_max):
    """Pick a 128-aligned K tile that minimizes F padding, keeping tiles large
    (>= bk_max // 2) so per-step overhead stays amortized."""
    fp128 = _round_up(feat, 128)
    if fp128 <= bk_max:
        return fp128, 1
    best = None
    n_lo = _cdiv(fp128, bk_max)
    for n_k in range(n_lo, 2 * n_lo + 1):
        bk = _round_up(_cdiv(feat, n_k), 128)
        if bk > bk_max or bk < bk_max // 2:
            continue
        key = (n_k * bk, n_k)            # minimize padded F, then fewest tiles
        if best is None or key < best[0]:
            best = (key, (bk, n_k))
    if best is None:
        return bk_max, _cdiv(feat, bk_max)
    return best[1]


def _select_bm(batch, bm, kind):
    """Clamp bm to the batch and (on v7x only) split a single-tile batch in two
    so both TensorCores get work on the 'parallel' axis."""
    bm_eff = min(bm, _round_up(batch, 16))
    n_bt = _cdiv(batch, bm_eff)
    if "v7" in kind and n_bt == 1 and batch >= 1024:
        bm_eff = _round_up(_cdiv(batch, 2), 256)
    return bm_eff


# ----------------------------------------------------------------------------
# Kernel
# ----------------------------------------------------------------------------
def _scsmd_kernel(x_ref, w1_ref, b1_ref, w23_ref, b23_ref, out_ref, h_acc,
                  *, f_valid, bk):
    """Fused MLP kernel.

    Grid = (batch tiles, K tiles over input features).  fc1 is accumulated over
    the K axis into a f32 VMEM scratch; on the final K step we apply bias + ReLU
    and the fused (fc2 @ classifier) head.  Dropout is identity at eval time.
    """
    k = pl.program_id(1)
    n_k = pl.num_programs(1)

    x = x_ref[...]                               # f32 tile straight from HBM
    if f_valid % bk != 0:
        # Ragged last K tile: the boundary block reads past F and the padded
        # region is undefined (could be NaN), so zero it before the dot.
        col = lax.broadcasted_iota(jnp.int32, x.shape, 1)
        x = jnp.where(col < (f_valid - k * bk), x, 0.0)

    # fc1 partial product: (bm, bk) @ (bk, 1024), bf16 operands, f32 accum.
    part = jnp.dot(x.astype(jnp.bfloat16), w1_ref[...],
                   preferred_element_type=jnp.float32)

    @pl.when(k == 0)
    def _():
        h_acc[...] = part                        # no explicit zero-fill pass

    @pl.when(k > 0)
    def _():
        h_acc[...] += part

    @pl.when(k == n_k - 1)
    def _():
        # fc1 bias + ReLU.
        h = jnp.maximum(h_acc[...] + b1_ref[...], 0.0)
        # Dropout: identity at inference time (PyTorch eval semantics).
        # Fused fc2 + classifier head: (bm, 1024) @ (1024, Cp).
        logits = jnp.dot(h.astype(w23_ref.dtype), w23_ref[...],
                         preferred_element_type=jnp.float32) + b23_ref[...]
        out_ref[...] = logits.astype(out_ref.dtype)


# ----------------------------------------------------------------------------
# One-time parameter preparation (call at model-load time, NOT per forward)
# ----------------------------------------------------------------------------
def prepare_params(w1, b1, w2, b2, w3, b3, *, bk=2048):
    """Fold fc2+classifier into one affine head (exact at inference), cast the
    streamed weights to bf16 and zero-pad to the tile grid.  Done once."""
    feat, hidden = w1.shape
    num_classes = w3.shape[1]

    bk_eff, n_k = _choose_k_tiling(feat, bk)
    fp = bk_eff * n_k
    cp = _round_up(num_classes, 128)             # lane-dense output stores

    hp = lax.Precision.HIGHEST
    w23 = jnp.dot(w2.astype(jnp.float32), w3.astype(jnp.float32), precision=hp)
    b23 = jnp.dot(b2.astype(jnp.float32), w3.astype(jnp.float32),
                  precision=hp) + b3.astype(jnp.float32)

    w1_p = jnp.pad(w1.astype(jnp.bfloat16), ((0, fp - feat), (0, 0)))
    b1_p = b1.astype(jnp.float32).reshape(1, hidden)
    w23_p = jnp.pad(w23.astype(jnp.bfloat16), ((0, 0), (0, cp - num_classes)))
    b23_p = jnp.pad(b23, ((0, cp - num_classes),)).reshape(1, cp)

    return {
        "w1_p": jax.device_put(w1_p),
        "b1_p": jax.device_put(b1_p),
        "w23_p": jax.device_put(w23_p),
        "b23_p": jax.device_put(b23_p),
        "bk": bk_eff,
        "num_classes": num_classes,
    }


# ----------------------------------------------------------------------------
# Forward
# ----------------------------------------------------------------------------
@functools.partial(jax.jit,
                   static_argnames=("bm", "bk", "num_classes", "vmem_limit"))
def _scsmd_forward_impl(x, w1_p, b1_p, w23_p, b23_p, *, bm, bk, num_classes,
                        vmem_limit):
    batch, feat = x.shape
    fp, hidden = w1_p.shape
    cp = w23_p.shape[1]
    n_k = fp // bk
    n_bt = _cdiv(batch, bm)

    kernel = functools.partial(_scsmd_kernel, f_valid=feat, bk=bk)

    flops = int(2 * batch * (fp * hidden + hidden * cp))
    bytes_accessed = int(x.size * 4
                         + n_bt * (w1_p.size * 2 + w23_p.size * 2
                                   + (hidden + cp) * 4)
                         + batch * cp * 4)

    out = pl.pallas_call(
        kernel,
        out_shape=jax.ShapeDtypeStruct((batch, cp), jnp.float32),
        grid_spec=pltpu.PrefetchScalarGridSpec(
            num_scalar_prefetch=0,
            grid=(n_bt, n_k),
            in_specs=[
                pl.BlockSpec((bm, bk), lambda i, k: (i, k)),       # x tile (f32)
                pl.BlockSpec((bk, hidden), lambda i, k: (k, 0)),   # fc1 W tile
                pl.BlockSpec((1, hidden), lambda i, k: (0, 0)),    # fc1 bias
                pl.BlockSpec((hidden, cp), lambda i, k: (0, 0)),   # fused head W
                pl.BlockSpec((1, cp), lambda i, k: (0, 0)),        # fused head b
            ],
            out_specs=pl.BlockSpec((bm, cp), lambda i, k: (i, 0)),
            scratch_shapes=[pltpu.VMEM((bm, hidden), jnp.float32)],
        ),
        compiler_params=pltpu.CompilerParams(
            dimension_semantics=("parallel", "arbitrary"),
            vmem_limit_bytes=vmem_limit),
        cost_estimate=pl.CostEstimate(flops=flops, transcendentals=0,
                                      bytes_accessed=bytes_accessed),
    )(x, w1_p, b1_p, w23_p, b23_p)

    return out[:, :num_classes]


def scsmd_forward(x, prepped, *, bm=None):
    """Forward pass.  `prepped` comes from `prepare_params` (one-time cost)."""
    kind = _device_kind()
    if bm is None:
        bm = _default_bm(kind)
    bm_eff = _select_bm(x.shape[0], bm, kind)
    return _scsmd_forward_impl(
        x, prepped["w1_p"], prepped["b1_p"], prepped["w23_p"], prepped["b23_p"],
        bm=bm_eff, bk=prepped["bk"], num_classes=prepped["num_classes"],
        vmem_limit=_default_vmem_limit(kind))


# ----------------------------------------------------------------------------
# Parameter construction + references (for the self-test)
# ----------------------------------------------------------------------------
def make_params(key, input_size, num_classes, latent_dim=64):
    """Deterministic synthetic parameters (PyTorch-Linear-like uniform init).

    PyTorch stores Linear weights as (out, in); build that way and transpose to
    (in, out) for the kernel so that y = x @ W_T + b.
    """
    ks = jax.random.split(key, 6)

    def linear(kw, kb, fan_in, fan_out):
        bound = 1.0 / (fan_in ** 0.5)
        w = jax.random.uniform(kw, (fan_out, fan_in), jnp.float32, -bound, bound)
        b = jax.random.uniform(kb, (fan_out,), jnp.float32, -bound, bound)
        return w.T, b

    w1, b1 = linear(ks[0], ks[1], input_size, 1024)
    w2, b2 = linear(ks[2], ks[3], 1024, latent_dim)
    w3, b3 = linear(ks[4], ks[5], latent_dim, num_classes)
    return w1, b1, w2, b2, w3, b3


def reference_forward(x, w1, b1, w2, b2, w3, b3):
    """Original-module semantics in f32 (dropout = identity at eval)."""
    hp = lax.Precision.HIGHEST
    h = jnp.maximum(jnp.dot(x, w1, precision=hp) + b1[None, :], 0.0)
    latent = jnp.dot(h, w2, precision=hp) + b2[None, :]
    return jnp.dot(latent, w3, precision=hp) + b3[None, :]


def quantized_reference(x, w1, b1, w2, b2, w3, b3):
    """Reference with the same bf16-quantized operands the kernel consumes."""
    hp = lax.Precision.HIGHEST
    f32 = jnp.float32
    xq = x.astype(jnp.bfloat16).astype(f32)
    w1q = w1.astype(jnp.bfloat16).astype(f32)
    w23 = jnp.dot(w2.astype(f32), w3.astype(f32), precision=hp)
    b23 = jnp.dot(b2.astype(f32), w3.astype(f32), precision=hp) + b3.astype(f32)
    w23q = w23.astype(jnp.bfloat16).astype(f32)
    h = jnp.maximum(jnp.dot(xq, w1q, precision=hp) + b1[None, :], 0.0)
    hq = h.astype(jnp.bfloat16).astype(f32)
    return jnp.dot(hq, w23q, precision=hp) + b23[None, :]


def _check(logits, x, params):
    ref_q = quantized_reference(x, *params)
    assert jnp.allclose(logits, ref_q, atol=2e-3, rtol=2e-3), (
        "mismatch vs quantized reference: "
        f"max abs diff {float(jnp.max(jnp.abs(logits - ref_q)))}")
    ref = reference_forward(x, *params)
    assert jnp.allclose(logits, ref, atol=5e-2, rtol=5e-2), (
        "mismatch vs f32 reference: "
        f"max abs diff {float(jnp.max(jnp.abs(logits - ref)))}")


if __name__ == "__main__":
    key = jax.random.PRNGKey(0)
    k_x1, k_p1, k_x2, k_p2 = jax.random.split(key, 4)

    # Case 1: deliberately ragged shapes (B not a multiple of 16, F not a
    # multiple of 128) to exercise the boundary-block masking path.  The real
    # model uses input_size ~ 21946.
    B1, F1, C1, L1 = 6, 500, 10, 64
    x1 = jax.random.normal(k_x1, (B1, F1), jnp.float32)
    params1 = make_params(k_p1, F1, C1, L1)
    prepped1 = prepare_params(*params1)             # one-time weight prep
    logits1 = jax.block_until_ready(scsmd_forward(x1, prepped1))
    assert logits1.shape == (B1, C1)
    _check(logits1, x1, params1)

    # Case 2: 128-aligned feature dim (single K tile, no ragged masking).
    B2, F2, C2, L2 = 33, 384, 5, 64
    x2 = jax.random.normal(k_x2, (B2, F2), jnp.float32)
    params2 = make_params(k_p2, F2, C2, L2)
    prepped2 = prepare_params(*params2)
    logits2 = jax.block_until_ready(scsmd_forward(x2, prepped2))
    assert logits2.shape == (B2, C2)
    _check(logits2, x2, params2)

    print("KERNEL_OK")
</pallas_src>

<mosaic_0001>
module attributes {stable_mosaic.version = 11 : i64} {
  func.func @_scsmd_kernel(%arg0: i32, %arg1: i32, %arg2: memref<16x512xf32, #tpu.memory_space<vmem>>, %arg3: memref<512x1024xbf16, #tpu.memory_space<vmem>>, %arg4: memref<1x1024xf32, #tpu.memory_space<vmem>>, %arg5: memref<1024x128xbf16, #tpu.memory_space<vmem>>, %arg6: memref<1x128xf32, #tpu.memory_space<vmem>>, %arg7: memref<16x128xf32, #tpu.memory_space<vmem>>, %arg8: memref<16x1024xf32, #tpu.memory_space<vmem>>) attributes {dimension_semantics = [#tpu.dimension_semantics<parallel>, #tpu.dimension_semantics<arbitrary>], iteration_bounds = array<i64: 1, 1>, scalar_prefetch = 0 : i64, scratch_operands = 1 : i64, tpu.core_type = #tpu.core_type<tc>, window_params = [{transform_indices = @transform_0, window_bounds = array<i64: 16, 512>}, {transform_indices = @transform_1, window_bounds = array<i64: 512, 1024>}, {pipeline_mode = #tpu.pipeline_mode<synchronous>, transform_indices = @transform_2, window_bounds = array<i64: 1, 1024>}, {pipeline_mode = #tpu.pipeline_mode<synchronous>, transform_indices = @transform_3, window_bounds = array<i64: 1024, 128>}, {pipeline_mode = #tpu.pipeline_mode<synchronous>, transform_indices = @transform_4, window_bounds = array<i64: 1, 128>}, {transform_indices = @transform_5, window_bounds = array<i64: 16, 128>}]} {
    %c0 = arith.constant 0 : index
    %c0_0 = arith.constant 0 : index
    %0 = vector.load %arg2[%c0, %c0_0] : memref<16x512xf32, #tpu.memory_space<vmem>>, vector<16x512xf32>
    %1 = tpu.iota {dimensions = array<i32: 1>} : vector<16x512xi32>
    %c512_i32 = arith.constant 512 : i32
    %2 = arith.muli %arg1, %c512_i32 : i32
    %c500_i32 = arith.constant 500 : i32
    %3 = arith.subi %c500_i32, %2 : i32
    %4 = vector.broadcast %3 : i32 to vector<16x512xi32>
    %5 = arith.cmpi slt, %1, %4 : vector<16x512xi32>
    %cst = arith.constant 0.000000e+00 : f32
    %6 = vector.broadcast %cst : f32 to vector<16x512xf32>
    %7 = arith.select %5, %0, %6 : vector<16x512xi1>, vector<16x512xf32>
    %8 = arith.truncf %7 : vector<16x512xf32> to vector<16x512xbf16>
    %c0_1 = arith.constant 0 : index
    %c0_2 = arith.constant 0 : index
    %9 = vector.load %arg3[%c0_1, %c0_2] : memref<512x1024xbf16, #tpu.memory_space<vmem>>, vector<512x1024xbf16>
    %cst_3 = arith.constant dense<0.000000e+00> : vector<16x1024xf32>
    %10 = tpu.matmul %8, %9, %cst_3 {dimension_numbers = #tpu.dot_dimension_numbers<[1], [0], [0], [1], [0, 0, 1, 1], [], []>} : vector<16x512xbf16>, vector<512x1024xbf16>, vector<16x1024xf32> -> vector<16x1024xf32>
    %c0_i32 = arith.constant 0 : i32
    %11 = arith.cmpi eq, %arg1, %c0_i32 : i32
    %12 = arith.extui %11 : i1 to i32
    %c0_i32_4 = arith.constant 0 : i32
    %13 = arith.cmpi ne, %12, %c0_i32_4 : i32
    scf.if %13 {
      %c0_9 = arith.constant 0 : index
      %c0_10 = arith.constant 0 : index
      %20 = vector.load %arg8[%c0_9, %c0_10] : memref<16x1024xf32, #tpu.memory_space<vmem>>, vector<16x1024xf32>
      tpu.vector_store %arg8[%c0_9, %c0_10], %10 {strides = array<i32>} : memref<16x1024xf32, #tpu.memory_space<vmem>>, vector<16x1024xf32>,
    } else {
    }
    %c0_i32_5 = arith.constant 0 : i32
    %14 = arith.cmpi sgt, %arg1, %c0_i32_5 : i32
    %15 = arith.extui %14 : i1 to i32
    %c0_i32_6 = arith.constant 0 : i32
    %16 = arith.cmpi ne, %15, %c0_i32_6 : i32
    scf.if %16 {
      %c0_9 = arith.constant 0 : index
      %c0_10 = arith.constant 0 : index
      %20 = vector.load %arg8[%c0_9, %c0_10] : memref<16x1024xf32, #tpu.memory_space<vmem>>, vector<16x1024xf32>
      %21 = arith.addf %20, %10 : vector<16x1024xf32>
      %c0_11 = arith.constant 0 : index
      %c0_12 = arith.constant 0 : index
      %22 = vector.load %arg8[%c0_11, %c0_12] : memref<16x1024xf32, #tpu.memory_space<vmem>>, vector<16x1024xf32>
      tpu.vector_store %arg8[%c0_11, %c0_12], %21 {strides = array<i32>} : memref<16x1024xf32, #tpu.memory_space<vmem>>, vector<16x1024xf32>,
    } else {
    }
    %c0_i32_7 = arith.constant 0 : i32
    %17 = arith.cmpi eq, %arg1, %c0_i32_7 : i32
    %18 = arith.extui %17 : i1 to i32
    %c0_i32_8 = arith.constant 0 : i32
    %19 = arith.cmpi ne, %18, %c0_i32_8 : i32
    scf.if %19 {
      %c0_9 = arith.constant 0 : index
      %c0_10 = arith.constant 0 : index
      %20 = vector.load %arg8[%c0_9, %c0_10] : memref<16x1024xf32, #tpu.memory_space<vmem>>, vector<16x1024xf32>
      %c0_11 = arith.constant 0 : index
      %c0_12 = arith.constant 0 : index
      %21 = vector.load %arg4[%c0_11, %c0_12] : memref<1x1024xf32, #tpu.memory_space<vmem>>, vector<1x1024xf32>
      %22 = vector.broadcast %21 : vector<1x1024xf32> to vector<16x1024xf32>
      %23 = arith.addf %20, %22 : vector<16x1024xf32>
      %cst_13 = arith.constant 0.000000e+00 : f32
      %24 = vector.broadcast %cst_13 : f32 to vector<16x1024xf32>
      %25 = arith.maximumf %23, %24 : vector<16x1024xf32>
      %26 = arith.truncf %25 : vector<16x1024xf32> to vector<16x1024xbf16>
      %c0_14 = arith.constant 0 : index
      %c0_15 = arith.constant 0 : index
      %27 = vector.load %arg5[%c0_14, %c0_15] : memref<1024x128xbf16, #tpu.memory_space<vmem>>, vector<1024x128xbf16>
      %cst_16 = arith.constant dense<0.000000e+00> : vector<16x128xf32>
      %28 = tpu.matmul %26, %27, %cst_16 {dimension_numbers = #tpu.dot_dimension_numbers<[1], [0], [0], [1], [0, 0, 1, 1], [], []>} : vector<16x1024xbf16>, vector<1024x128xbf16>, vector<16x128xf32> -> vector<16x128xf32>
      %c0_17 = arith.constant 0 : index
      %c0_18 = arith.constant 0 : index
      %29 = vector.load %arg6[%c0_17, %c0_18] : memref<1x128xf32, #tpu.memory_space<vmem>>, vector<1x128xf32>
      %30 = vector.broadcast %29 : vector<1x128xf32> to vector<16x128xf32>
      %31 = arith.addf %28, %30 : vector<16x128xf32>
      %c0_19 = arith.constant 0 : index
      %c0_20 = arith.constant 0 : index
      %32 = vector.load %arg7[%c0_19, %c0_20] : memref<16x128xf32, #tpu.memory_space<vmem>>, vector<16x128xf32>
      tpu.vector_store %arg7[%c0_19, %c0_20], %31 {strides = array<i32>} : memref<16x128xf32, #tpu.memory_space<vmem>>, vector<16x128xf32>,
    } else {
    }
    return
  }
  func.func @transform_0(%arg0: i32, %arg1: i32) -> (i32, i32) {
    %c0_i32 = arith.constant 0 : i32
    return %arg0, %arg1 : i32, i32
  }
  func.func @transform_1(%arg0: i32, %arg1: i32) -> (i32, i32) {
    %c0_i32 = arith.constant 0 : i32
    %c0_i32_0 = arith.constant 0 : i32
    return %arg1, %c0_i32 : i32, i32
  }
  func.func @transform_2(%arg0: i32, %arg1: i32) -> (i32, i32) {
    %c0_i32 = arith.constant 0 : i32
    %c0_i32_0 = arith.constant 0 : i32
    %c0_i32_1 = arith.constant 0 : i32
    return %c0_i32, %c0_i32_0 : i32, i32
  }
  func.func @transform_3(%arg0: i32, %arg1: i32) -> (i32, i32) {
    %c0_i32 = arith.constant 0 : i32
    %c0_i32_0 = arith.constant 0 : i32
    %c0_i32_1 = arith.constant 0 : i32
    return %c0_i32, %c0_i32_0 : i32, i32
  }
  func.func @transform_4(%arg0: i32, %arg1: i32) -> (i32, i32) {
    %c0_i32 = arith.constant 0 : i32
    %c0_i32_0 = arith.constant 0 : i32
    %c0_i32_1 = arith.constant 0 : i32
    return %c0_i32, %c0_i32_0 : i32, i32
  }
  func.func @transform_5(%arg0: i32, %arg1: i32) -> (i32, i32) {
    %c0_i32 = arith.constant 0 : i32
    %c0_i32_0 = arith.constant 0 : i32
    return %arg0, %c0_i32 : i32, i32
  }
}

</mosaic_0001>

<llo_original>
// kernel: _scsmd_forward_impl.1
$region0: #{_scsmd_forward_impl.1}
  #allocation0 [shape = 'u32[]', space=smem, size = 0x4, offset = 0x4, fixed_abs, tag = 'smem constant byte address 0x4 - core index']
  #allocation1 [shape = 'u32[144,128]{1,0:T(1,128)}', space=vmem, size = 0x12000, scoped, tag = 'internal scratch']
  #allocation2 [shape = 'f32[16,1024]{1,0:T(8,128)}', space=vmem, size = 0x10000, scoped, tag = 'scratch operand']
  %s0 = inlined_call_operand.hbm [shape: f32[6,500], index: 0, kind: input, shape index: {}]
  %s1 = inlined_call_operand.hbm [shape: bf16[512,1024], index: 1, kind: input, shape index: {}]
  %s2 = inlined_call_operand.hbm [shape: f32[1,1024], index: 2, kind: input, shape index: {}]
  %s3 = inlined_call_operand.hbm [shape: bf16[1024,128], index: 3, kind: input, shape index: {}]
  %s4 = inlined_call_operand.vmem [shape: f32[1,128], index: 4, kind: input, shape index: {}]
  %s5 = inlined_call_operand.hbm [shape: f32[6,128], index: 5, kind: output, shape index: {}]
  %s6 = sld [smem:[#allocation0]]
  $region58: #{_scsmd_forward_impl.1} parent=0
    _
  %s8 = ssub.s32 1, %s6
  %s9 = scalar_select 0, %s8, %s6
  $region1: #{_scsmd_forward_impl.1} parent=0
    #allocation3 [shape = 'u8[32768]{0}', space=vmem, size = 0x8000, scoped, tag = 'input window, operand 0, single buffered']
    #allocation4 [shape = 's32[1]{0}', space=sflag, size = 0x4, scoped, tag = 'scoped memory for _scsmd_forward_impl.1']
    #allocation5 [shape = 's32[1]{0}', space=sflag, size = 0x4, scoped, tag = 'scoped memory for _scsmd_forward_impl.1']
    #allocation6 [shape = 'u8[1048576]{0}', space=vmem, size = 0x100000, scoped, tag = 'input window, operand 1, single buffered']
    #allocation7 [shape = 's32[1]{0}', space=sflag, size = 0x4, scoped, tag = 'scoped memory for _scsmd_forward_impl.1']
    #allocation8 [shape = 'u8[4096]{0}', space=vmem, size = 0x1000, scoped, tag = 'input window, operand 2, single buffered']
    #allocation9 [shape = 'u8[262144]{0}', space=vmem, size = 0x40000, scoped, tag = 'input window, operand 3, single buffered']
    #allocation10 [shape = 's32[1]{0}', space=sflag, size = 0x4, scoped, tag = 'scoped memory for _scsmd_forward_impl.1']
    #allocation11 [shape = 'u8[8192]{0}', space=vmem, size = 0x2000, scoped, tag = 'output window, operand 0, single buffered']
    %10 = vsyncpa [#allocation4], 0
    %11 = vsyncpa [#allocation7], 0
    %12 = vsyncpa [#allocation10], 0
    %13 = vsyncpa [#allocation5], 0
    // Predicated region
    $region2: #{_scsmd_forward_impl.1} parent=1 // pred_check
      _
    $region3: #{_scsmd_forward_impl.1} parent=1 // pred_check_branch
      %15 = sbr.rel (0) target = $region5
    $region4: #{_scsmd_forward_impl.1} parent=1 // pred_region
      %s17 = ssub.s32 1024, 512
      %18 = vsyncadd [#allocation4], %s17
      %s19 = sshll.u32 [#allocation3], 4
      %s20 = int_to_ptr.vmem [resolvable:$true] %s19
      %25 = dma.hbm_to_vmem [thread:$0]  %s0, 512, %s20, [#allocation4], 512, 512, 32
    $region5: #{_scsmd_forward_impl.1} parent=1 // pred_fallthru
      _
    // Predicated region
    $region6: #{_scsmd_forward_impl.1} parent=1 // pred_check
      _
    $region7: #{_scsmd_forward_impl.1} parent=1 // pred_check_branch
      %27 = sbr.rel (0) target = $region9
    $region8: #{_scsmd_forward_impl.1} parent=1 // pred_region
      %s29 = ssub.s32 32768, 32768
      %30 = vsyncadd [#allocation7], %s29
      %s31 = sshll.u32 [#allocation6], 4
      %s32 = int_to_ptr.vmem [resolvable:$true] %s31
      %37 = dma.hbm_to_vmem [thread:$0]  %s1, 32768, %s32, [#allocation7], 512, 512, 32
    $region9: #{_scsmd_forward_impl.1} parent=1 // pred_fallthru
      _
    // Predicated region
    $region10: #{_scsmd_forward_impl.1} parent=1 // pred_check
      _
    $region11: #{_scsmd_forward_impl.1} parent=1 // pred_check_branch
      %39 = sbr.rel (0) target = $region13
    $region12: #{_scsmd_forward_impl.1} parent=1 // pred_region
      %s41 = ssub.s32 128, 128
      %42 = vsyncadd [#allocation7], %s41
      %s44 = sshll.u32 [#allocation8], 4
      %s45 = int_to_ptr.vmem [resolvable:$true] %s44
      %47 = dma.hbm_to_vmem [thread:$0]  %s2, 128, %s45, [#allocation7]
    $region13: #{_scsmd_forward_impl.1} parent=1 // pred_fallthru
      _
    // Predicated region
    $region14: #{_scsmd_forward_impl.1} parent=1 // pred_check
      _
    $region15: #{_scsmd_forward_impl.1} parent=1 // pred_check_branch
      %49 = sbr.rel (0) target = $region17
    $region16: #{_scsmd_forward_impl.1} parent=1 // pred_region
      %s51 = ssub.s32 8192, 8192
      %52 = vsyncadd [#allocation10], %s51
      %s53 = sshll.u32 [#allocation9], 4
      %s54 = int_to_ptr.vmem [resolvable:$true] %s53
      %59 = dma.hbm_to_vmem [thread:$0]  %s3, 8192, %s54, [#allocation10], 64, 64, 4
    $region17: #{_scsmd_forward_impl.1} parent=1 // pred_fallthru
      _
    // Predicated region
    $region18: #{_scsmd_forward_impl.1} parent=1 // pred_check
      _
    $region19: #{_scsmd_forward_impl.1} parent=1 // pred_check_branch
      %61 = sbr.rel (0) target = $region21
    $region20: #{_scsmd_forward_impl.1} parent=1 // pred_region
      _
    $region21: #{_scsmd_forward_impl.1} parent=1 // pred_fallthru
      _
    // Predicated region
    $region22: #{_scsmd_forward_impl.1} parent=1 // pred_check
      _
    $region23: #{_scsmd_forward_impl.1} parent=1 // pred_check_branch
      %63 = sbr.rel (0) target = $region25
    $region24: #{_scsmd_forward_impl.1} parent=1 // pred_region
      %64 = dma.done [#allocation4], 1024
    $region25: #{_scsmd_forward_impl.1} parent=1 // pred_fallthru
      _
    // Predicated region
    $region26: #{_scsmd_forward_impl.1} parent=1 // pred_check
      _
    $region27: #{_scsmd_forward_impl.1} parent=1 // pred_check_branch
      %66 = sbr.rel (0) target = $region29
    $region28: #{_scsmd_forward_impl.1} parent=1 // pred_region
      %67 = dma.done [#allocation7], 32768
    $region29: #{_scsmd_forward_impl.1} parent=1 // pred_fallthru
      _
    // Predicated region
    $region30: #{_scsmd_forward_impl.1} parent=1 // pred_check
      _
    $region31: #{_scsmd_forward_impl.1} parent=1 // pred_check_branch
      %69 = sbr.rel (0) target = $region33
    $region32: #{_scsmd_forward_impl.1} parent=1 // pred_region
      %70 = dma.done [#allocation7], 128
    $region33: #{_scsmd_forward_impl.1} parent=1 // pred_fallthru
      _
    // Predicated region
    $region34: #{_scsmd_forward_impl.1} parent=1 // pred_check
      _
    $region35: #{_scsmd_forward_impl.1} parent=1 // pred_check_branch
      %72 = sbr.rel (0) target = $region37
    $region36: #{_scsmd_forward_impl.1} parent=1 // pred_region
      %73 = dma.done [#allocation10], 8192
    $region37: #{_scsmd_forward_impl.1} parent=1 // pred_fallthru
      _
    %v75 = vld [vmem:[#allocation3] sm:$0xff]
    %v76 = vld [vmem:[#allocation3 + $0x8] sm:$0xff]
    %v77 = vld [vmem:[#allocation3 + $0x10] sm:$0xff]
    %v78 = vld [vmem:[#allocation3 + $0x18] sm:$0xff]
    %v79 = vld [vmem:[#allocation3 + $0x20] sm:$0xff]
    %v80 = vld [vmem:[#allocation3 + $0x28] sm:$0xff]
    %v81 = vld [vmem:[#allocation3 + $0x30] sm:$0xff]
    %v82 = vld [vmem:[#allocation3 + $0x38] sm:$0xff]
    %v83 = vlaneseq
    %v84 = vand.u32 %v83, 127
    %v85 = vadd.s32 %v84, 128
    %v86 = vadd.s32 %v84, 256
    %v87 = vadd.s32 %v84, 384
    %s88 = smul.u32 0, 512
    %s89 = ssub.s32 500, %s88
    %v90 = vstv %s89
    %vm91 = vcmp.lt.s32.totalorder %v84, %v90
    %vm92 = vcmp.lt.s32.totalorder %v85, %v90
    %vm93 = vcmp.lt.s32.totalorder %v86, %v90
    %vm94 = vcmp.lt.s32.totalorder %v87, %v90
    %v95 = vsel %vm91, %v75, 0.0
    %v96 = vsel %vm92, %v76, 0.0
    %v97 = vsel %vm93, %v77, 0.0
    %v98 = vsel %vm94, %v78, 0.0
    %v99 = vsel %vm91, %v79, 0.0
    %v100 = vsel %vm92, %v80, 0.0
    %v101 = vsel %vm93, %v81, 0.0
    %v102 = vsel %vm94, %v82, 0.0
    %v103 = vpack.c.bf16 %v99, %v95
    %v104 = vpack.c.bf16 %v100, %v96
    %v105 = vpack.c.bf16 %v101, %v97
    %v106 = vpack.c.bf16 %v102, %v98
    %v107 = vld [vmem:[#allocation6] sm:$0xff]
    %v108 = vld [vmem:[#allocation6 + $0x8] sm:$0xff]
    %v109 = vld [vmem:[#allocation6 + $0x10] sm:$0xff]
    %v110 = vld [vmem:[#allocation6 + $0x18] sm:$0xff]
    %v111 = vld [vmem:[#allocation6 + $0x20] sm:$0xff]
    %v112 = vld [vmem:[#allocation6 + $0x28] sm:$0xff]
    %v113 = vld [vmem:[#allocation6 + $0x30] sm:$0xff]
    %v114 = vld [vmem:[#allocation6 + $0x38] sm:$0xff]
    %v115 = vld [vmem:[#allocation6 + $0x40] sm:$0xff]
    %v116 = vld [vmem:[#allocation6 + $0x48] sm:$0xff]
    %v117 = vld [vmem:[#allocation6 + $0x50] sm:$0xff]
    %v118 = vld [vmem:[#allocation6 + $0x58] sm:$0xff]
    %v119 = vld [vmem:[#allocation6 + $0x60] sm:$0xff]
    %v120 = vld [vmem:[#allocation6 + $0x68] sm:$0xff]
    %v121 = vld [vmem:[#allocation6 + $0x70] sm:$0xff]
    %v122 = vld [vmem:[#allocation6 + $0x78] sm:$0xff]
    %v123 = vld [vmem:[#allocation6 + $0x80] sm:$0xff]
    %v124 = vld [vmem:[#allocation6 + $0x88] sm:$0xff]
    %v125 = vld [vmem:[#allocation6 + $0x90] sm:$0xff]
    %v126 = vld [vmem:[#allocation6 + $0x98] sm:$0xff]
    %v127 = vld [vmem:[#allocation6 + $0xa0] sm:$0xff]
    %v128 = vld [vmem:[#allocation6 + $0xa8] sm:$0xff]
    %v129 = vld [vmem:[#allocation6 + $0xb0] sm:$0xff]
    %v130 = vld [vmem:[#allocation6 + $0xb8] sm:$0xff]
    %v131 = vld [vmem:[#allocation6 + $0xc0] sm:$0xff]
    %v132 = vld [vmem:[#allocation6 + $0xc8] sm:$0xff]
    %v133 = vld [vmem:[#allocation6 + $0xd0] sm:$0xff]
    %v134 = vld [vmem:[#allocation6 + $0xd8] sm:$0xff]
    %v135 = vld [vmem:[#allocation6 + $0xe0] sm:$0xff]
    %v136 = vld [vmem:[#allocation6 + $0xe8] sm:$0xff]
    %v137 = vld [vmem:[#allocation6 + $0xf0] sm:$0xff]
    %v138 = vld [vmem:[#allocation6 + $0xf8] sm:$0xff]
    %v139 = vld [vmem:[#allocation6 + $0x100] sm:$0xff]
    %v140 = vld [vmem:[#allocation6 + $0x108] sm:$0xff]
    %v141 = vld [vmem:[#allocation6 + $0x110] sm:$0xff]
    %v142 = vld [vmem:[#allocation6 + $0x118] sm:$0xff]
    %v143 = vld [vmem:[#allocation6 + $0x120] sm:$0xff]
    %v144 = vld [vmem:[#allocation6 + $0x128] sm:$0xff]
    %v145 = vld [vmem:[#allocation6 + $0x130] sm:$0xff]
    %v146 = vld [vmem:[#allocation6 + $0x138] sm:$0xff]
    %v147 = vld [vmem:[#allocation6 + $0x140] sm:$0xff]
    %v148 = vld [vmem:[#allocation6 + $0x148] sm:$0xff]
    %v149 = vld [vmem:[#allocation6 + $0x150] sm:$0xff]
    %v150 = vld [vmem:[#allocation6 + $0x158] sm:$0xff]
    %v151 = vld [vmem:[#allocation6 + $0x160] sm:$0xff]
    %v152 = vld [vmem:[#allocation6 + $0x168] sm:$0xff]
    %v153 = vld [vmem:[#allocation6 + $0x170] sm:$0xff]
    %v154 = vld [vmem:[#allocation6 + $0x178] sm:$0xff]
    %v155 = vld [vmem:[#allocation6 + $0x180] sm:$0xff]
    %v156 = vld [vmem:[#allocation6 + $0x188] sm:$0xff]
    %v157 = vld [vmem:[#allocation6 + $0x190] sm:$0xff]
    %v158 = vld [vmem:[#allocation6 + $0x198] sm:$0xff]
    %v159 = vld [vmem:[#allocation6 + $0x1a0] sm:$0xff]
    %v160 = vld [vmem:[#allocation6 + $0x1a8] sm:$0xff]
    %v161 = vld [vmem:[#allocation6 + $0x1b0] sm:$0xff]
    %v162 = vld [vmem:[#allocation6 + $0x1b8] sm:$0xff]
    %v163 = vld [vmem:[#allocation6 + $0x1c0] sm:$0xff]
    %v164 = vld [vmem:[#allocation6 + $0x1c8] sm:$0xff]
    %v165 = vld [vmem:[#allocation6 + $0x1d0] sm:$0xff]
    %v166 = vld [vmem:[#allocation6 + $0x1d8] sm:$0xff]
    %v167 = vld [vmem:[#allocation6 + $0x1e0] sm:$0xff]
    %v168 = vld [vmem:[#allocation6 + $0x1e8] sm:$0xff]
    %v169 = vld [vmem:[#allocation6 + $0x1f0] sm:$0xff]
    %v170 = vld [vmem:[#allocation6 + $0x1f8] sm:$0xff]
    %v171 = vld [vmem:[#allocation6 + $0x200] sm:$0xff]
    %v172 = vld [vmem:[#allocation6 + $0x208] sm:$0xff]
    %v173 = vld [vmem:[#allocation6 + $0x210] sm:$0xff]
    %v174 = vld [vmem:[#allocation6 + $0x218] sm:$0xff]
    %v175 = vld [vmem:[#allocation6 + $0x220] sm:$0xff]
    %v176 = vld [vmem:[#allocation6 + $0x228] sm:$0xff]
    %v177 = vld [vmem:[#allocation6 + $0x230] sm:$0xff]
    %v178 = vld [vmem:[#allocation6 + $0x238] sm:$0xff]
    %v179 = vld [vmem:[#allocation6 + $0x240] sm:$0xff]
    %v180 = vld [vmem:[#allocation6 + $0x248] sm:$0xff]
    %v181 = vld [vmem:[#allocation6 + $0x250] sm:$0xff]
    %v182 = vld [vmem:[#allocation6 + $0x258] sm:$0xff]
    %v183 = vld [vmem:[#allocation6 + $0x260] sm:$0xff]
    %v184 = vld [vmem:[#allocation6 + $0x268] sm:$0xff]
    %v185 = vld [vmem:[#allocation6 + $0x270] sm:$0xff]
    %v186 = vld [vmem:[#allocation6 + $0x278] sm:$0xff]
    %v187 = vld [vmem:[#allocation6 + $0x280] sm:$0xff]
    %v188 = vld [vmem:[#allocation6 + $0x288] sm:$0xff]
    %v189 = vld [vmem:[#allocation6 + $0x290] sm:$0xff]
    %v190 = vld [vmem:[#allocation6 + $0x298] sm:$0xff]
    %v191 = vld [vmem:[#allocation6 + $0x2a0] sm:$0xff]
    %v192 = vld [vmem:[#allocation6 + $0x2a8] sm:$0xff]
    %v193 = vld [vmem:[#allocation6 + $0x2b0] sm:$0xff]
    %v194 = vld [vmem:[#allocation6 + $0x2b8] sm:$0xff]
    %v195 = vld [vmem:[#allocation6 + $0x2c0] sm:$0xff]
    %v196 = vld [vmem:[#allocation6 + $0x2c8] sm:$0xff]
    %v197 = vld [vmem:[#allocation6 + $0x2d0] sm:$0xff]
    %v198 = vld [vmem:[#allocation6 + $0x2d8] sm:$0xff]
    %v199 = vld [vmem:[#allocation6 + $0x2e0] sm:$0xff]
    %v200 = vld [vmem:[#allocation6 + $0x2e8] sm:$0xff]
    %v201 = vld [vmem:[#allocation6 + $0x2f0] sm:$0xff]
    %v202 = vld [vmem:[#allocation6 + $0x2f8] sm:$0xff]
    %v203 = vld [vmem:[#allocation6 + $0x300] sm:$0xff]
    %v204 = vld [vmem:[#allocation6 + $0x308] sm:$0xff]
    %v205 = vld [vmem:[#allocation6 + $0x310] sm:$0xff]
    %v206 = vld [vmem:[#allocation6 + $0x318] sm:$0xff]
    %v207 = vld [vmem:[#allocation6 + $0x320] sm:$0xff]
    %v208 = vld [vmem:[#allocation6 + $0x328] sm:$0xff]
    %v209 = vld [vmem:[#allocation6 + $0x330] sm:$0xff]
    %v210 = vld [vmem:[#allocation6 + $0x338] sm:$0xff]
    %v211 = vld [vmem:[#allocation6 + $0x340] sm:$0xff]
    %v212 = vld [vmem:[#allocation6 + $0x348] sm:$0xff]
    %v213 = vld [vmem:[#allocation6 + $0x350] sm:$0xff]
    %v214 = vld [vmem:[#allocation6 + $0x358] sm:$0xff]
    %v215 = vld [vmem:[#allocation6 + $0x360] sm:$0xff]
    %v216 = vld [vmem:[#allocation6 + $0x368] sm:$0xff]
    %v217 = vld [vmem:[#allocation6 + $0x370] sm:$0xff]
    %v218 = vld [vmem:[#allocation6 + $0x378] sm:$0xff]
    %v219 = vld [vmem:[#allocation6 + $0x380] sm:$0xff]
    %v220 = vld [vmem:[#allocation6 + $0x388] sm:$0xff]
    %v221 = vld [vmem:[#allocation6 + $0x390] sm:$0xff]
    %v222 = vld [vmem:[#allocation6 + $0x398] sm:$0xff]
    %v223 = vld [vmem:[#allocation6 + $0x3a0] sm:$0xff]
    %v224 = vld [vmem:[#allocation6 + $0x3a8] sm:$0xff]
    %v225 = vld [vmem:[#allocation6 + $0x3b0] sm:$0xff]
    %v226 = vld [vmem:[#allocation6 + $0x3b8] sm:$0xff]
    %v227 = vld [vmem:[#allocation6 + $0x3c0] sm:$0xff]
    %v228 = vld [vmem:[#allocation6 + $0x3c8] sm:$0xff]
    %v229 = vld [vmem:[#allocation6 + $0x3d0] sm:$0xff]
    %v230 = vld [vmem:[#allocation6 + $0x3d8] sm:$0xff]
    %v231 = vld [vmem:[#allocation6 + $0x3e0] sm:$0xff]
    %v232 = vld [vmem:[#allocation6 + $0x3e8] sm:$0xff]
    %v233 = vld [vmem:[#allocation6 + $0x3f0] sm:$0xff]
    %v234 = vld [vmem:[#allocation6 + $0x3f8] sm:$0xff]
    %v235 = vld [vmem:[#allocation6 + $0x400] sm:$0xff]
    %v236 = vld [vmem:[#allocation6 + $0x408] sm:$0xff]
    %v237 = vld [vmem:[#allocation6 + $0x410] sm:$0xff]
    %v238 = vld [vmem:[#allocation6 + $0x418] sm:$0xff]
    %v239 = vld [vmem:[#allocation6 + $0x420] sm:$0xff]
    %v240 = vld [vmem:[#allocation6 + $0x428] sm:$0xff]
    %v241 = vld [vmem:[#allocation6 + $0x430] sm:$0xff]
    %v242 = vld [vmem:[#allocation6 + $0x438] sm:$0xff]
    %v243 = vld [vmem:[#allocation6 + $0x440] sm:$0xff]
    %v244 = vld [vmem:[#allocation6 + $0x448] sm:$0xff]
    %v245 = vld [vmem:[#allocation6 + $0x450] sm:$0xff]
    %v246 = vld [vmem:[#allocation6 + $0x458] sm:$0xff]
    %v247 = vld [vmem:[#allocation6 + $0x460] sm:$0xff]
    %v248 = vld [vmem:[#allocation6 + $0x468] sm:$0xff]
    %v249 = vld [vmem:[#allocation6 + $0x470] sm:$0xff]
    %v250 = vld [vmem:[#allocation6 + $0x478] sm:$0xff]
    %v251 = vld [vmem:[#allocation6 + $0x480] sm:$0xff]
    %v252 = vld [vmem:[#allocation6 + $0x488] sm:$0xff]
    %v253 = vld [vmem:[#allocation6 + $0x490] sm:$0xff]
    %v254 = vld [vmem:[#allocation6 + $0x498] sm:$0xff]
    %v255 = vld [vmem:[#allocation6 + $0x4a0] sm:$0xff]
    %v256 = vld [vmem:[#allocation6 + $0x4a8] sm:$0xff]
    %v257 = vld [vmem:[#allocation6 + $0x4b0] sm:$0xff]
    %v258 = vld [vmem:[#allocation6 + $0x4b8] sm:$0xff]
    %v259 = vld [vmem:[#allocation6 + $0x4c0] sm:$0xff]
    %v260 = vld [vmem:[#allocation6 + $0x4c8] sm:$0xff]
    %v261 = vld [vmem:[#allocation6 + $0x4d0] sm:$0xff]
    %v262 = vld [vmem:[#allocation6 + $0x4d8] sm:$0xff]
    %v263 = vld [vmem:[#allocation6 + $0x4e0] sm:$0xff]
    %v264 = vld [vmem:[#allocation6 + $0x4e8] sm:$0xff]
    %v265 = vld [vmem:[#allocation6 + $0x4f0] sm:$0xff]
    %v266 = vld [vmem:[#allocation6 + $0x4f8] sm:$0xff]
    %v267 = vld [vmem:[#allocation6 + $0x500] sm:$0xff]
    %v268 = vld [vmem:[#allocation6 + $0x508] sm:$0xff]
    %v269 = vld [vmem:[#allocation6 + $0x510] sm:$0xff]
    %v270 = vld [vmem:[#allocation6 + $0x518] sm:$0xff]
    %v271 = vld [vmem:[#allocation6 + $0x520] sm:$0xff]
    %v272 = vld [vmem:[#allocation6 + $0x528] sm:$0xff]
    %v273 = vld [vmem:[#allocation6 + $0x530] sm:$0xff]
    %v274 = vld [vmem:[#allocation6 + $0x538] sm:$0xff]
    %v275 = vld [vmem:[#allocation6 + $0x540] sm:$0xff]
    %v276 = vld [vmem:[#allocation6 + $0x548] sm:$0xff]
    %v277 = vld [vmem:[#allocation6 + $0x550] sm:$0xff]
    %v278 = vld [vmem:[#allocation6 + $0x558] sm:$0xff]
    %v279 = vld [vmem:[#allocation6 + $0x560] sm:$0xff]
    %v280 = vld [vmem:[#allocation6 + $0x568] sm:$0xff]
    %v281 = vld [vmem:[#allocation6 + $0x570] sm:$0xff]
    %v282 = vld [vmem:[#allocation6 + $0x578] sm:$0xff]
    %v283 = vld [vmem:[#allocation6 + $0x580] sm:$0xff]
    %v284 = vld [vmem:[#allocation6 + $0x588] sm:$0xff]
    %v285 = vld [vmem:[#allocation6 + $0x590] sm:$0xff]
    %v286 = vld [vmem:[#allocation6 + $0x598] sm:$0xff]
    %v287 = vld [vmem:[#allocation6 + $0x5a0] sm:$0xff]
    %v288 = vld [vmem:[#allocation6 + $0x5a8] sm:$0xff]
    %v289 = vld [vmem:[#allocation6 + $0x5b0] sm:$0xff]
    %v290 = vld [vmem:[#allocation6 + $0x5b8] sm:$0xff]
    %v291 = vld [vmem:[#allocation6 + $0x5c0] sm:$0xff]
    %v292 = vld [vmem:[#allocation6 + $0x5c8] sm:$0xff]
    %v293 = vld [vmem:[#allocation6 + $0x5d0] sm:$0xff]
    %v294 = vld [vmem:[#allocation6 + $0x5d8] sm:$0xff]
    %v295 = vld [vmem:[#allocation6 + $0x5e0] sm:$0xff]
    %v296 = vld [vmem:[#allocation6 + $0x5e8] sm:$0xff]
    %v297 = vld [vmem:[#allocation6 + $0x5f0] sm:$0xff]
    %v298 = vld [vmem:[#allocation6 + $0x5f8] sm:$0xff]
    %v299 = vld [vmem:[#allocation6 + $0x600] sm:$0xff]
    %v300 = vld [vmem:[#allocation6 + $0x608] sm:$0xff]
    %v301 = vld [vmem:[#allocation6 + $0x610] sm:$0xff]
    %v302 = vld [vmem:[#allocation6 + $0x618] sm:$0xff]
    %v303 = vld [vmem:[#allocation6 + $0x620] sm:$0xff]
    %v304 = vld [vmem:[#allocation6 + $0x628] sm:$0xff]
    %v305 = vld [vmem:[#allocation6 + $0x630] sm:$0xff]
    %v306 = vld [vmem:[#allocation6 + $0x638] sm:$0xff]
    %v307 = vld [vmem:[#allocation6 + $0x640] sm:$0xff]
    %v308 = vld [vmem:[#allocation6 + $0x648] sm:$0xff]
    %v309 = vld [vmem:[#allocation6 + $0x650] sm:$0xff]
    %v310 = vld [vmem:[#allocation6 + $0x658] sm:$0xff]
    %v311 = vld [vmem:[#allocation6 + $0x660] sm:$0xff]
    %v312 = vld [vmem:[#allocation6 + $0x668] sm:$0xff]
    %v313 = vld [vmem:[#allocation6 + $0x670] sm:$0xff]
    %v314 = vld [vmem:[#allocation6 + $0x678] sm:$0xff]
    %v315 = vld [vmem:[#allocation6 + $0x680] sm:$0xff]
    %v316 = vld [vmem:[#allocation6 + $0x688] sm:$0xff]
    %v317 = vld [vmem:[#allocation6 + $0x690] sm:$0xff]
    %v318 = vld [vmem:[#allocation6 + $0x698] sm:$0xff]
    %v319 = vld [vmem:[#allocation6 + $0x6a0] sm:$0xff]
    %v320 = vld [vmem:[#allocation6 + $0x6a8] sm:$0xff]
    %v321 = vld [vmem:[#allocation6 + $0x6b0] sm:$0xff]
    %v322 = vld [vmem:[#allocation6 + $0x6b8] sm:$0xff]
    %v323 = vld [vmem:[#allocation6 + $0x6c0] sm:$0xff]
    %v324 = vld [vmem:[#allocation6 + $0x6c8] sm:$0xff]
    %v325 = vld [vmem:[#allocation6 + $0x6d0] sm:$0xff]
    %v326 = vld [vmem:[#allocation6 + $0x6d8] sm:$0xff]
    %v327 = vld [vmem:[#allocation6 + $0x6e0] sm:$0xff]
    %v328 = vld [vmem:[#allocation6 + $0x6e8] sm:$0xff]
    %v329 = vld [vmem:[#allocation6 + $0x6f0] sm:$0xff]
    %v330 = vld [vmem:[#allocation6 + $0x6f8] sm:$0xff]
    %v331 = vld [vmem:[#allocation6 + $0x700] sm:$0xff]
    %v332 = vld [vmem:[#allocation6 + $0x708] sm:$0xff]
    %v333 = vld [vmem:[#allocation6 + $0x710] sm:$0xff]
    %v334 = vld [vmem:[#allocation6 + $0x718] sm:$0xff]
    %v335 = vld [vmem:[#allocation6 + $0x720] sm:$0xff]
    %v336 = vld [vmem:[#allocation6 + $0x728] sm:$0xff]
    %v337 = vld [vmem:[#allocation6 + $0x730] sm:$0xff]
    %v338 = vld [vmem:[#allocation6 + $0x738] sm:$0xff]
    %v339 = vld [vmem:[#allocation6 + $0x740] sm:$0xff]
    %v340 = vld [vmem:[#allocation6 + $0x748] sm:$0xff]
    %v341 = vld [vmem:[#allocation6 + $0x750] sm:$0xff]
    %v342 = vld [vmem:[#allocation6 + $0x758] sm:$0xff]
    %v343 = vld [vmem:[#allocation6 + $0x760] sm:$0xff]
    %v344 = vld [vmem:[#allocation6 + $0x768] sm:$0xff]
    %v345 = vld [vmem:[#allocation6 + $0x770] sm:$0xff]
    %v346 = vld [vmem:[#allocation6 + $0x778] sm:$0xff]
    %v347 = vld [vmem:[#allocation6 + $0x780] sm:$0xff]
    %v348 = vld [vmem:[#allocation6 + $0x788] sm:$0xff]
    %v349 = vld [vmem:[#allocation6 + $0x790] sm:$0xff]
    %v350 = vld [vmem:[#allocation6 + $0x798] sm:$0xff]
    %v351 = vld [vmem:[#allocation6 + $0x7a0] sm:$0xff]
    %v352 = vld [vmem:[#allocation6 + $0x7a8] sm:$0xff]
    %v353 = vld [vmem:[#allocation6 + $0x7b0] sm:$0xff]
    %v354 = vld [vmem:[#allocation6 + $0x7b8] sm:$0xff]
    %v355 = vld [vmem:[#allocation6 + $0x7c0] sm:$0xff]
    %v356 = vld [vmem:[#allocation6 + $0x7c8] sm:$0xff]
    %v357 = vld [vmem:[#allocation6 + $0x7d0] sm:$0xff]
    %v358 = vld [vmem:[#allocation6 + $0x7d8] sm:$0xff]
    %v359 = vld [vmem:[#allocation6 + $0x7e0] sm:$0xff]
    %v360 = vld [vmem:[#allocation6 + $0x7e8] sm:$0xff]
    %v361 = vld [vmem:[#allocation6 + $0x7f0] sm:$0xff]
    %v362 = vld [vmem:[#allocation6 + $0x7f8] sm:$0xff]
    %v619 = vunpack.c.l.b16 %v107
    %v620 = vunpack.c.h.b16 %v107
    %v621 = vunpack.c.l.b16 %v108
    %v622 = vunpack.c.h.b16 %v108
    %v623 = vunpack.c.l.b16 %v109
    %v624 = vunpack.c.h.b16 %v109
    %v625 = vunpack.c.l.b16 %v110
    %v626 = vunpack.c.h.b16 %v110
    %v627 = vunpack.c.l.b16 %v111
    %v628 = vunpack.c.h.b16 %v111
    %v629 = vunpack.c.l.b16 %v112
    %v630 = vunpack.c.h.b16 %v112
    %v631 = vunpack.c.l.b16 %v113
    %v632 = vunpack.c.h.b16 %v113
    %v633 = vunpack.c.l.b16 %v114
    %v634 = vunpack.c.h.b16 %v114
    %v635 = vunpack.c.l.b16 %v115
    %v636 = vunpack.c.h.b16 %v115
    %v637 = vunpack.c.l.b16 %v116
    %v638 = vunpack.c.h.b16 %v116
    %v639 = vunpack.c.l.b16 %v117
    %v640 = vunpack.c.h.b16 %v117
    %v641 = vunpack.c.l.b16 %v118
    %v642 = vunpack.c.h.b16 %v118
    %v643 = vunpack.c.l.b16 %v119
    %v644 = vunpack.c.h.b16 %v119
    %v645 = vunpack.c.l.b16 %v120
    %v646 = vunpack.c.h.b16 %v120
    %v647 = vunpack.c.l.b16 %v121
    %v648 = vunpack.c.h.b16 %v121
    %v649 = vunpack.c.l.b16 %v122
    %v650 = vunpack.c.h.b16 %v122
    %v651 = vunpack.c.l.b16 %v123
    %v652 = vunpack.c.h.b16 %v123
    %v653 = vunpack.c.l.b16 %v124
    %v654 = vunpack.c.h.b16 %v124
    %v655 = vunpack.c.l.b16 %v125
    %v656 = vunpack.c.h.b16 %v125
    %v657 = vunpack.c.l.b16 %v126
    %v658 = vunpack.c.h.b16 %v126
    %v659 = vunpack.c.l.b16 %v127
    %v660 = vunpack.c.h.b16 %v127
    %v661 = vunpack.c.l.b16 %v128
    %v662 = vunpack.c.h.b16 %v128
    %v663 = vunpack.c.l.b16 %v129
    %v664 = vunpack.c.h.b16 %v129
    %v665 = vunpack.c.l.b16 %v130
    %v666 = vunpack.c.h.b16 %v130
    %v667 = vunpack.c.l.b16 %v131
    %v668 = vunpack.c.h.b16 %v131
    %v669 = vunpack.c.l.b16 %v132
    %v670 = vunpack.c.h.b16 %v132
    %v671 = vunpack.c.l.b16 %v133
    %v672 = vunpack.c.h.b16 %v133
    %v673 = vunpack.c.l.b16 %v134
    %v674 = vunpack.c.h.b16 %v134
    %v675 = vunpack.c.l.b16 %v135
    %v676 = vunpack.c.h.b16 %v135
    %v677 = vunpack.c.l.b16 %v136
    %v678 = vunpack.c.h.b16 %v136
    %v679 = vunpack.c.l.b16 %v137
    %v680 = vunpack.c.h.b16 %v137
    %v681 = vunpack.c.l.b16 %v138
    %v682 = vunpack.c.h.b16 %v138
    %v683 = vunpack.c.l.b16 %v139
    %v684 = vunpack.c.h.b16 %v139
    %v685 = vunpack.c.l.b16 %v140
    %v686 = vunpack.c.h.b16 %v140
    %v687 = vunpack.c.l.b16 %v141
    %v688 = vunpack.c.h.b16 %v141
    %v689 = vunpack.c.l.b16 %v142
    %v690 = vunpack.c.h.b16 %v142
    %v691 = vunpack.c.l.b16 %v143
    %v692 = vunpack.c.h.b16 %v143
    %v693 = vunpack.c.l.b16 %v144
    %v694 = vunpack.c.h.b16 %v144
    %v695 = vunpack.c.l.b16 %v145
    %v696 = vunpack.c.h.b16 %v145
    %v697 = vunpack.c.l.b16 %v146
    %v698 = vunpack.c.h.b16 %v146
    %v699 = vunpack.c.l.b16 %v147
    %v700 = vunpack.c.h.b16 %v147
    %v701 = vunpack.c.l.b16 %v148
    %v702 = vunpack.c.h.b16 %v148
    %v703 = vunpack.c.l.b16 %v149
    %v704 = vunpack.c.h.b16 %v149
    %v705 = vunpack.c.l.b16 %v150
    %v706 = vunpack.c.h.b16 %v150
    %v707 = vunpack.c.l.b16 %v151
    %v708 = vunpack.c.h.b16 %v151
    %v709 = vunpack.c.l.b16 %v152
    %v710 = vunpack.c.h.b16 %v152
    %v711 = vunpack.c.l.b16 %v153
    %v712 = vunpack.c.h.b16 %v153
    %v713 = vunpack.c.l.b16 %v154
    %v714 = vunpack.c.h.b16 %v154
    %v715 = vunpack.c.l.b16 %v155
    %v716 = vunpack.c.h.b16 %v155
    %v717 = vunpack.c.l.b16 %v156
    %v718 = vunpack.c.h.b16 %v156
    %v719 = vunpack.c.l.b16 %v157
    %v720 = vunpack.c.h.b16 %v157
    %v721 = vunpack.c.l.b16 %v158
    %v722 = vunpack.c.h.b16 %v158
    %v723 = vunpack.c.l.b16 %v159
    %v724 = vunpack.c.h.b16 %v159
    %v725 = vunpack.c.l.b16 %v160
    %v726 = vunpack.c.h.b16 %v160
    %v727 = vunpack.c.l.b16 %v161
    %v728 = vunpack.c.h.b16 %v161
    %v729 = vunpack.c.l.b16 %v162
    %v730 = vunpack.c.h.b16 %v162
    %v731 = vunpack.c.l.b16 %v163
    %v732 = vunpack.c.h.b16 %v163
    %v733 = vunpack.c.l.b16 %v164
    %v734 = vunpack.c.h.b16 %v164
    %v735 = vunpack.c.l.b16 %v165
    %v736 = vunpack.c.h.b16 %v165
    %v737 = vunpack.c.l.b16 %v166
    %v738 = vunpack.c.h.b16 %v166
    %v739 = vunpack.c.l.b16 %v167
    %v740 = vunpack.c.h.b16 %v167
    %v741 = vunpack.c.l.b16 %v168
    %v742 = vunpack.c.h.b16 %v168
    %v743 = vunpack.c.l.b16 %v169
    %v744 = vunpack.c.h.b16 %v169
    %v745 = vunpack.c.l.b16 %v170
    %v746 = vunpack.c.h.b16 %v170
    %v747 = vunpack.c.l.b16 %v171
    %v748 = vunpack.c.h.b16 %v171
    %v749 = vunpack.c.l.b16 %v172
    %v750 = vunpack.c.h.b16 %v172
    %v751 = vunpack.c.l.b16 %v173
    %v752 = vunpack.c.h.b16 %v173
    %v753 = vunpack.c.l.b16 %v174
    %v754 = vunpack.c.h.b16 %v174
    %v755 = vunpack.c.l.b16 %v175
    %v756 = vunpack.c.h.b16 %v175
    %v757 = vunpack.c.l.b16 %v176
    %v758 = vunpack.c.h.b16 %v176
    %v759 = vunpack.c.l.b16 %v177
    %v760 = vunpack.c.h.b16 %v177
    %v761 = vunpack.c.l.b16 %v178
    %v762 = vunpack.c.h.b16 %v178
    %v763 = vunpack.c.l.b16 %v179
    %v764 = vunpack.c.h.b16 %v179
    %v765 = vunpack.c.l.b16 %v180
    %v766 = vunpack.c.h.b16 %v180
    %v767 = vunpack.c.l.b16 %v181
    %v768 = vunpack.c.h.b16 %v181
    %v769 = vunpack.c.l.b16 %v182
    %v770 = vunpack.c.h.b16 %v182
    %v771 = vunpack.c.l.b16 %v183
    %v772 = vunpack.c.h.b16 %v183
    %v773 = vunpack.c.l.b16 %v184
    %v774 = vunpack.c.h.b16 %v184
    %v775 = vunpack.c.l.b16 %v185
    %v776 = vunpack.c.h.b16 %v185
    %v777 = vunpack.c.l.b16 %v186
    %v778 = vunpack.c.h.b16 %v186
    %v779 = vunpack.c.l.b16 %v187
    %v780 = vunpack.c.h.b16 %v187
    %v781 = vunpack.c.l.b16 %v188
    %v782 = vunpack.c.h.b16 %v188
    %v783 = vunpack.c.l.b16 %v189
    %v784 = vunpack.c.h.b16 %v189
    %v785 = vunpack.c.l.b16 %v190
    %v786 = vunpack.c.h.b16 %v190
    %v787 = vunpack.c.l.b16 %v191
    %v788 = vunpack.c.h.b16 %v191
    %v789 = vunpack.c.l.b16 %v192
    %v790 = vunpack.c.h.b16 %v192
    %v791 = vunpack.c.l.b16 %v193
    %v792 = vunpack.c.h.b16 %v193
    %v793 = vunpack.c.l.b16 %v194
    %v794 = vunpack.c.h.b16 %v194
    %v795 = vunpack.c.l.b16 %v195
    %v796 = vunpack.c.h.b16 %v195
    %v797 = vunpack.c.l.b16 %v196
    %v798 = vunpack.c.h.b16 %v196
    %v799 = vunpack.c.l.b16 %v197
    %v800 = vunpack.c.h.b16 %v197
    %v801 = vunpack.c.l.b16 %v198
    %v802 = vunpack.c.h.b16 %v198
    %v803 = vunpack.c.l.b16 %v199
    %v804 = vunpack.c.h.b16 %v199
    %v805 = vunpack.c.l.b16 %v200
    %v806 = vunpack.c.h.b16 %v200
    %v807 = vunpack.c.l.b16 %v201
    %v808 = vunpack.c.h.b16 %v201
    %v809 = vunpack.c.l.b16 %v202
    %v810 = vunpack.c.h.b16 %v202
    %v811 = vunpack.c.l.b16 %v203
    %v812 = vunpack.c.h.b16 %v203
    %v813 = vunpack.c.l.b16 %v204
    %v814 = vunpack.c.h.b16 %v204
    %v815 = vunpack.c.l.b16 %v205
    %v816 = vunpack.c.h.b16 %v205
    %v817 = vunpack.c.l.b16 %v206
    %v818 = vunpack.c.h.b16 %v206
    %v819 = vunpack.c.l.b16 %v207
    %v820 = vunpack.c.h.b16 %v207
    %v821 = vunpack.c.l.b16 %v208
    %v822 = vunpack.c.h.b16 %v208
    %v823 = vunpack.c.l.b16 %v209
    %v824 = vunpack.c.h.b16 %v209
    %v825 = vunpack.c.l.b16 %v210
    %v826 = vunpack.c.h.b16 %v210
    %v827 = vunpack.c.l.b16 %v211
    %v828 = vunpack.c.h.b16 %v211
    %v829 = vunpack.c.l.b16 %v212
    %v830 = vunpack.c.h.b16 %v212
    %v831 = vunpack.c.l.b16 %v213
    %v832 = vunpack.c.h.b16 %v213
    %v833 = vunpack.c.l.b16 %v214
    %v834 = vunpack.c.h.b16 %v214
    %v835 = vunpack.c.l.b16 %v215
    %v836 = vunpack.c.h.b16 %v215
    %v837 = vunpack.c.l.b16 %v216
    %v838 = vunpack.c.h.b16 %v216
    %v839 = vunpack.c.l.b16 %v217
    %v840 = vunpack.c.h.b16 %v217
    %v841 = vunpack.c.l.b16 %v218
    %v842 = vunpack.c.h.b16 %v218
    %v843 = vunpack.c.l.b16 %v219
    %v844 = vunpack.c.h.b16 %v219
    %v845 = vunpack.c.l.b16 %v220
    %v846 = vunpack.c.h.b16 %v220
    %v847 = vunpack.c.l.b16 %v221
    %v848 = vunpack.c.h.b16 %v221
    %v849 = vunpack.c.l.b16 %v222
    %v850 = vunpack.c.h.b16 %v222
    %v851 = vunpack.c.l.b16 %v223
    %v852 = vunpack.c.h.b16 %v223
    %v853 = vunpack.c.l.b16 %v224
    %v854 = vunpack.c.h.b16 %v224
    %v855 = vunpack.c.l.b16 %v225
    %v856 = vunpack.c.h.b16 %v225
    %v857 = vunpack.c.l.b16 %v226
    %v858 = vunpack.c.h.b16 %v226
    %v859 = vunpack.c.l.b16 %v227
    %v860 = vunpack.c.h.b16 %v227
    %v861 = vunpack.c.l.b16 %v228
    %v862 = vunpack.c.h.b16 %v228
    %v863 = vunpack.c.l.b16 %v229
    %v864 = vunpack.c.h.b16 %v229
    %v865 = vunpack.c.l.b16 %v230
    %v866 = vunpack.c.h.b16 %v230
    %v867 = vunpack.c.l.b16 %v231
    %v868 = vunpack.c.h.b16 %v231
    %v869 = vunpack.c.l.b16 %v232
    %v870 = vunpack.c.h.b16 %v232
    %v871 = vunpack.c.l.b16 %v233
    %v872 = vunpack.c.h.b16 %v233
    %v873 = vunpack.c.l.b16 %v234
    %v874 = vunpack.c.h.b16 %v234
    %v875 = vunpack.c.l.b16 %v235
    %v876 = vunpack.c.h.b16 %v235
    %v877 = vunpack.c.l.b16 %v236
    %v878 = vunpack.c.h.b16 %v236
    %v879 = vunpack.c.l.b16 %v237
    %v880 = vunpack.c.h.b16 %v237
    %v881 = vunpack.c.l.b16 %v238
    %v882 = vunpack.c.h.b16 %v238
    %v883 = vunpack.c.l.b16 %v239
    %v884 = vunpack.c.h.b16 %v239
    %v885 = vunpack.c.l.b16 %v240
    %v886 = vunpack.c.h.b16 %v240
    %v887 = vunpack.c.l.b16 %v241
    %v888 = vunpack.c.h.b16 %v241
    %v889 = vunpack.c.l.b16 %v242
    %v890 = vunpack.c.h.b16 %v242
    %v891 = vunpack.c.l.b16 %v243
    %v892 = vunpack.c.h.b16 %v243
    %v893 = vunpack.c.l.b16 %v244
    %v894 = vunpack.c.h.b16 %v244
    %v895 = vunpack.c.l.b16 %v245
    %v896 = vunpack.c.h.b16 %v245
    %v897 = vunpack.c.l.b16 %v246
    %v898 = vunpack.c.h.b16 %v246
    %v899 = vunpack.c.l.b16 %v247
    %v900 = vunpack.c.h.b16 %v247
    %v901 = vunpack.c.l.b16 %v248
    %v902 = vunpack.c.h.b16 %v248
    %v903 = vunpack.c.l.b16 %v249
    %v904 = vunpack.c.h.b16 %v249
    %v905 = vunpack.c.l.b16 %v250
    %v906 = vunpack.c.h.b16 %v250
    %v907 = vunpack.c.l.b16 %v251
    %v908 = vunpack.c.h.b16 %v251
    %v909 = vunpack.c.l.b16 %v252
    %v910 = vunpack.c.h.b16 %v252
    %v911 = vunpack.c.l.b16 %v253
    %v912 = vunpack.c.h.b16 %v253
    %v913 = vunpack.c.l.b16 %v254
    %v914 = vunpack.c.h.b16 %v254
    %v915 = vunpack.c.l.b16 %v255
    %v916 = vunpack.c.h.b16 %v255
    %v917 = vunpack.c.l.b16 %v256
    %v918 = vunpack.c.h.b16 %v256
    %v919 = vunpack.c.l.b16 %v257
    %v920 = vunpack.c.h.b16 %v257
    %v921 = vunpack.c.l.b16 %v258
    %v922 = vunpack.c.h.b16 %v258
    %v923 = vunpack.c.l.b16 %v259
    %v924 = vunpack.c.h.b16 %v259
    %v925 = vunpack.c.l.b16 %v260
    %v926 = vunpack.c.h.b16 %v260
    %v927 = vunpack.c.l.b16 %v261
    %v928 = vunpack.c.h.b16 %v261
    %v929 = vunpack.c.l.b16 %v262
    %v930 = vunpack.c.h.b16 %v262
    %v931 = vunpack.c.l.b16 %v263
    %v932 = vunpack.c.h.b16 %v263
    %v933 = vunpack.c.l.b16 %v264
    %v934 = vunpack.c.h.b16 %v264
    %v935 = vunpack.c.l.b16 %v265
    %v936 = vunpack.c.h.b16 %v265
    %v937 = vunpack.c.l.b16 %v266
    %v938 = vunpack.c.h.b16 %v266
    %v939 = vunpack.c.l.b16 %v267
    %v940 = vunpack.c.h.b16 %v267
    %v941 = vunpack.c.l.b16 %v268
    %v942 = vunpack.c.h.b16 %v268
    %v943 = vunpack.c.l.b16 %v269
    %v944 = vunpack.c.h.b16 %v269
    %v945 = vunpack.c.l.b16 %v270
    %v946 = vunpack.c.h.b16 %v270
    %v947 = vunpack.c.l.b16 %v271
    %v948 = vunpack.c.h.b16 %v271
    %v949 = vunpack.c.l.b16 %v272
    %v950 = vunpack.c.h.b16 %v272
    %v951 = vunpack.c.l.b16 %v273
    %v952 = vunpack.c.h.b16 %v273
    %v953 = vunpack.c.l.b16 %v274
    %v954 = vunpack.c.h.b16 %v274
    %v955 = vunpack.c.l.b16 %v275
    %v956 = vunpack.c.h.b16 %v275
    %v957 = vunpack.c.l.b16 %v276
    %v958 = vunpack.c.h.b16 %v276
    %v959 = vunpack.c.l.b16 %v277
    %v960 = vunpack.c.h.b16 %v277
    %v961 = vunpack.c.l.b16 %v278
    %v962 = vunpack.c.h.b16 %v278
    %v963 = vunpack.c.l.b16 %v279
    %v964 = vunpack.c.h.b16 %v279
    %v965 = vunpack.c.l.b16 %v280
    %v966 = vunpack.c.h.b16 %v280
    %v967 = vunpack.c.l.b16 %v281
    %v968 = vunpack.c.h.b16 %v281
    %v969 = vunpack.c.l.b16 %v282
    %v970 = vunpack.c.h.b16 %v282
    %v971 = vunpack.c.l.b16 %v283
    %v972 = vunpack.c.h.b16 %v283
    %v973 = vunpack.c.l.b16 %v284
    %v974 = vunpack.c.h.b16 %v284
    %v975 = vunpack.c.l.b16 %v285
    %v976 = vunpack.c.h.b16 %v285
    %v977 = vunpack.c.l.b16 %v286
    %v978 = vunpack.c.h.b16 %v286
    %v979 = vunpack.c.l.b16 %v287
    %v980 = vunpack.c.h.b16 %v287
    %v981 = vunpack.c.l.b16 %v288
    %v982 = vunpack.c.h.b16 %v288
    %v983 = vunpack.c.l.b16 %v289
    %v984 = vunpack.c.h.b16 %v289
    %v985 = vunpack.c.l.b16 %v290
    %v986 = vunpack.c.h.b16 %v290
    %v987 = vunpack.c.l.b16 %v291
    %v988 = vunpack.c.h.b16 %v291
    %v989 = vunpack.c.l.b16 %v292
    %v990 = vunpack.c.h.b16 %v292
    %v991 = vunpack.c.l.b16 %v293
    %v992 = vunpack.c.h.b16 %v293
    %v993 = vunpack.c.l.b16 %v294
    %v994 = vunpack.c.h.b16 %v294
    %v995 = vunpack.c.l.b16 %v295
    %v996 = vunpack.c.h.b16 %v295
    %v997 = vunpack.c.l.b16 %v296
    %v998 = vunpack.c.h.b16 %v296
    %v999 = vunpack.c.l.b16 %v297
    %v1000 = vunpack.c.h.b16 %v297
    %v1001 = vunpack.c.l.b16 %v298
    %v1002 = vunpack.c.h.b16 %v298
    %v1003 = vunpack.c.l.b16 %v299
    %v1004 = vunpack.c.h.b16 %v299
    %v1005 = vunpack.c.l.b16 %v300
    %v1006 = vunpack.c.h.b16 %v300
    %v1007 = vunpack.c.l.b16 %v301
    %v1008 = vunpack.c.h.b16 %v301
    %v1009 = vunpack.c.l.b16 %v302
    %v1010 = vunpack.c.h.b16 %v302
    %v1011 = vunpack.c.l.b16 %v303
    %v1012 = vunpack.c.h.b16 %v303
    %v1013 = vunpack.c.l.b16 %v304
    %v1014 = vunpack.c.h.b16 %v304
    %v1015 = vunpack.c.l.b16 %v305
    %v1016 = vunpack.c.h.b16 %v305
    %v1017 = vunpack.c.l.b16 %v306
    %v1018 = vunpack.c.h.b16 %v306
    %v1019 = vunpack.c.l.b16 %v307
    %v1020 = vunpack.c.h.b16 %v307
    %v1021 = vunpack.c.l.b16 %v308
    %v1022 = vunpack.c.h.b16 %v308
    %v1023 = vunpack.c.l.b16 %v309
    %v1024 = vunpack.c.h.b16 %v309
    %v1025 = vunpack.c.l.b16 %v310
    %v1026 = vunpack.c.h.b16 %v310
    %v1027 = vunpack.c.l.b16 %v311
    %v1028 = vunpack.c.h.b16 %v311
    %v1029 = vunpack.c.l.b16 %v312
    %v1030 = vunpack.c.h.b16 %v312
    %v1031 = vunpack.c.l.b16 %v313
    %v1032 = vunpack.c.h.b16 %v313
    %v1033 = vunpack.c.l.b16 %v314
    %v1034 = vunpack.c.h.b16 %v314
    %v1035 = vunpack.c.l.b16 %v315
    %v1036 = vunpack.c.h.b16 %v315
    %v1037 = vunpack.c.l.b16 %v316
    %v1038 = vunpack.c.h.b16 %v316
    %v1039 = vunpack.c.l.b16 %v317
    %v1040 = vunpack.c.h.b16 %v317
    %v1041 = vunpack.c.l.b16 %v318
    %v1042 = vunpack.c.h.b16 %v318
    %v1043 = vunpack.c.l.b16 %v319
    %v1044 = vunpack.c.h.b16 %v319
    %v1045 = vunpack.c.l.b16 %v320
    %v1046 = vunpack.c.h.b16 %v320
    %v1047 = vunpack.c.l.b16 %v321
    %v1048 = vunpack.c.h.b16 %v321
    %v1049 = vunpack.c.l.b16 %v322
    %v1050 = vunpack.c.h.b16 %v322
    %v1051 = vunpack.c.l.b16 %v323
    %v1052 = vunpack.c.h.b16 %v323
    %v1053 = vunpack.c.l.b16 %v324
    %v1054 = vunpack.c.h.b16 %v324
    %v1055 = vunpack.c.l.b16 %v325
    %v1056 = vunpack.c.h.b16 %v325
    %v1057 = vunpack.c.l.b16 %v326
    %v1058 = vunpack.c.h.b16 %v326
    %v1059 = vunpack.c.l.b16 %v327
    %v1060 = vunpack.c.h.b16 %v327
    %v1061 = vunpack.c.l.b16 %v328
    %v1062 = vunpack.c.h.b16 %v328
    %v1063 = vunpack.c.l.b16 %v329
    %v1064 = vunpack.c.h.b16 %v329
    %v1065 = vunpack.c.l.b16 %v330
    %v1066 = vunpack.c.h.b16 %v330
    %v1067 = vunpack.c.l.b16 %v331
    %v1068 = vunpack.c.h.b16 %v331
    %v1069 = vunpack.c.l.b16 %v332
    %v1070 = vunpack.c.h.b16 %v332
    %v1071 = vunpack.c.l.b16 %v333
    %v1072 = vunpack.c.h.b16 %v333
    %v1073 = vunpack.c.l.b16 %v334
    %v1074 = vunpack.c.h.b16 %v334
    %v1075 = vunpack.c.l.b16 %v335
    %v1076 = vunpack.c.h.b16 %v335
    %v1077 = vunpack.c.l.b16 %v336
    %v1078 = vunpack.c.h.b16 %v336
    %v1079 = vunpack.c.l.b16 %v337
    %v1080 = vunpack.c.h.b16 %v337
    %v1081 = vunpack.c.l.b16 %v338
    %v1082 = vunpack.c.h.b16 %v338
    %v1083 = vunpack.c.l.b16 %v339
    %v1084 = vunpack.c.h.b16 %v339
    %v1085 = vunpack.c.l.b16 %v340
    %v1086 = vunpack.c.h.b16 %v340
    %v1087 = vunpack.c.l.b16 %v341
    %v1088 = vunpack.c.h.b16 %v341
    %v1089 = vunpack.c.l.b16 %v342
    %v1090 = vunpack.c.h.b16 %v342
    %v1091 = vunpack.c.l.b16 %v343
    %v1092 = vunpack.c.h.b16 %v343
    %v1093 = vunpack.c.l.b16 %v344
    %v1094 = vunpack.c.h.b16 %v344
    %v1095 = vunpack.c.l.b16 %v345
    %v1096 = vunpack.c.h.b16 %v345
    %v1097 = vunpack.c.l.b16 %v346
    %v1098 = vunpack.c.h.b16 %v346
    %v1099 = vunpack.c.l.b16 %v347
    %v1100 = vunpack.c.h.b16 %v347
    %v1101 = vunpack.c.l.b16 %v348
    %v1102 = vunpack.c.h.b16 %v348
    %v1103 = vunpack.c.l.b16 %v349
    %v1104 = vunpack.c.h.b16 %v349
    %v1105 = vunpack.c.l.b16 %v350
    %v1106 = vunpack.c.h.b16 %v350
    %v1107 = vunpack.c.l.b16 %v351
    %v1108 = vunpack.c.h.b16 %v351
    %v1109 = vunpack.c.l.b16 %v352
    %v1110 = vunpack.c.h.b16 %v352
    %v1111 = vunpack.c.l.b16 %v353
    %v1112 = vunpack.c.h.b16 %v353
    %v1113 = vunpack.c.l.b16 %v354
    %v1114 = vunpack.c.h.b16 %v354
    %v1115 = vunpack.c.l.b16 %v355
    %v1116 = vunpack.c.h.b16 %v355
    %v1117 = vunpack.c.l.b16 %v356
    %v1118 = vunpack.c.h.b16 %v356
    %v1119 = vunpack.c.l.b16 %v357
    %v1120 = vunpack.c.h.b16 %v357
    %v1121 = vunpack.c.l.b16 %v358
    %v1122 = vunpack.c.h.b16 %v358
    %v1123 = vunpack.c.l.b16 %v359
    %v1124 = vunpack.c.h.b16 %v359
    %v1125 = vunpack.c.l.b16 %v360
    %v1126 = vunpack.c.h.b16 %v360
    %v1127 = vunpack.c.l.b16 %v361
    %v1128 = vunpack.c.h.b16 %v361
    %v1129 = vunpack.c.l.b16 %v362
    %v1130 = vunpack.c.h.b16 %v362
    %v1131 = vpack.c.b16 %v627, %v619
    %v1132 = vpack.c.b16 %v628, %v620
    %v1133 = vpack.c.b16 %v629, %v621
    %v1134 = vpack.c.b16 %v630, %v622
    %v1135 = vpack.c.b16 %v631, %v623
    %v1136 = vpack.c.b16 %v632, %v624
    %v1137 = vpack.c.b16 %v633, %v625
    %v1138 = vpack.c.b16 %v634, %v626
    %v1139 = vpack.c.b16 %v643, %v635
    %v1140 = vpack.c.b16 %v644, %v636
    %v1141 = vpack.c.b16 %v645, %v637
    %v1142 = vpack.c.b16 %v646, %v638
    %v1143 = vpack.c.b16 %v647, %v639
    %v1144 = vpack.c.b16 %v648, %v640
    %v1145 = vpack.c.b16 %v649, %v641
    %v1146 = vpack.c.b16 %v650, %v642
    %v1147 = vpack.c.b16 %v659, %v651
    %v1148 = vpack.c.b16 %v660, %v652
    %v1149 = vpack.c.b16 %v661, %v653
    %v1150 = vpack.c.b16 %v662, %v654
    %v1151 = vpack.c.b16 %v663, %v655
    %v1152 = vpack.c.b16 %v664, %v656
    %v1153 = vpack.c.b16 %v665, %v657
    %v1154 = vpack.c.b16 %v666, %v658
    %v1155 = vpack.c.b16 %v675, %v667
    %v1156 = vpack.c.b16 %v676, %v668
    %v1157 = vpack.c.b16 %v677, %v669
    %v1158 = vpack.c.b16 %v678, %v670
    %v1159 = vpack.c.b16 %v679, %v671
    %v1160 = vpack.c.b16 %v680, %v672
    %v1161 = vpack.c.b16 %v681, %v673
    %v1162 = vpack.c.b16 %v682, %v674
    %v1163 = vpack.c.b16 %v691, %v683
    %v1164 = vpack.c.b16 %v692, %v684
    %v1165 = vpack.c.b16 %v693, %v685
    %v1166 = vpack.c.b16 %v694, %v686
    %v1167 = vpack.c.b16 %v695, %v687
    %v1168 = vpack.c.b16 %v696, %v688
    %v1169 = vpack.c.b16 %v697, %v689
    %v1170 = vpack.c.b16 %v698, %v690
    %v1171 = vpack.c.b16 %v707, %v699
    %v1172 = vpack.c.b16 %v708, %v700
    %v1173 = vpack.c.b16 %v709, %v701
    %v1174 = vpack.c.b16 %v710, %v702
    %v1175 = vpack.c.b16 %v711, %v703
    %v1176 = vpack.c.b16 %v712, %v704
    %v1177 = vpack.c.b16 %v713, %v705
    %v1178 = vpack.c.b16 %v714, %v706
    %v1179 = vpack.c.b16 %v723, %v715
    %v1180 = vpack.c.b16 %v724, %v716
    %v1181 = vpack.c.b16 %v725, %v717
    %v1182 = vpack.c.b16 %v726, %v718
    %v1183 = vpack.c.b16 %v727, %v719
    %v1184 = vpack.c.b16 %v728, %v720
    %v1185 = vpack.c.b16 %v729, %v721
    %v1186 = vpack.c.b16 %v730, %v722
    %v1187 = vpack.c.b16 %v739, %v731
    %v1188 = vpack.c.b16 %v740, %v732
    %v1189 = vpack.c.b16 %v741, %v733
    %v1190 = vpack.c.b16 %v742, %v734
    %v1191 = vpack.c.b16 %v743, %v735
    %v1192 = vpack.c.b16 %v744, %v736
    %v1193 = vpack.c.b16 %v745, %v737
    %v1194 = vpack.c.b16 %v746, %v738
    %v1195 = vpack.c.b16 %v755, %v747
    %v1196 = vpack.c.b16 %v756, %v748
    %v1197 = vpack.c.b16 %v757, %v749
    %v1198 = vpack.c.b16 %v758, %v750
    %v1199 = vpack.c.b16 %v759, %v751
    %v1200 = vpack.c.b16 %v760, %v752
    %v1201 = vpack.c.b16 %v761, %v753
    %v1202 = vpack.c.b16 %v762, %v754
    %v1203 = vpack.c.b16 %v771, %v763
    %v1204 = vpack.c.b16 %v772, %v764
    %v1205 = vpack.c.b16 %v773, %v765
    %v1206 = vpack.c.b16 %v774, %v766
    %v1207 = vpack.c.b16 %v775, %v767
    %v1208 = vpack.c.b16 %v776, %v768
    %v1209 = vpack.c.b16 %v777, %v769
    %v1210 = vpack.c.b16 %v778, %v770
    %v1211 = vpack.c.b16 %v787, %v779
    %v1212 = vpack.c.b16 %v788, %v780
    %v1213 = vpack.c.b16 %v789, %v781
    %v1214 = vpack.c.b16 %v790, %v782
    %v1215 = vpack.c.b16 %v791, %v783
    %v1216 = vpack.c.b16 %v792, %v784
    %v1217 = vpack.c.b16 %v793, %v785
    %v1218 = vpack.c.b16 %v794, %v786
    %v1219 = vpack.c.b16 %v803, %v795
    %v1220 = vpack.c.b16 %v804, %v796
    %v1221 = vpack.c.b16 %v805, %v797
    %v1222 = vpack.c.b16 %v806, %v798
    %v1223 = vpack.c.b16 %v807, %v799
    %v1224 = vpack.c.b16 %v808, %v800
    %v1225 = vpack.c.b16 %v809, %v801
    %v1226 = vpack.c.b16 %v810, %v802
    %v1227 = vpack.c.b16 %v819, %v811
    %v1228 = vpack.c.b16 %v820, %v812
    %v1229 = vpack.c.b16 %v821, %v813
    %v1230 = vpack.c.b16 %v822, %v814
    %v1231 = vpack.c.b16 %v823, %v815
    %v1232 = vpack.c.b16 %v824, %v816
    %v1233 = vpack.c.b16 %v825, %v817
    %v1234 = vpack.c.b16 %v826, %v818
    %v1235 = vpack.c.b16 %v835, %v827
    %v1236 = vpack.c.b16 %v836, %v828
    %v1237 = vpack.c.b16 %v837, %v829
    %v1238 = vpack.c.b16 %v838, %v830
    %v1239 = vpack.c.b16 %v839, %v831
    %v1240 = vpack.c.b16 %v840, %v832
    %v1241 = vpack.c.b16 %v841, %v833
    %v1242 = vpack.c.b16 %v842, %v834
    %v1243 = vpack.c.b16 %v851, %v843
    %v1244 = vpack.c.b16 %v852, %v844
    %v1245 = vpack.c.b16 %v853, %v845
    %v1246 = vpack.c.b16 %v854, %v846
    %v1247 = vpack.c.b16 %v855, %v847
    %v1248 = vpack.c.b16 %v856, %v848
    %v1249 = vpack.c.b16 %v857, %v849
    %v1250 = vpack.c.b16 %v858, %v850
    %v1251 = vpack.c.b16 %v867, %v859
    %v1252 = vpack.c.b16 %v868, %v860
    %v1253 = vpack.c.b16 %v869, %v861
    %v1254 = vpack.c.b16 %v870, %v862
    %v1255 = vpack.c.b16 %v871, %v863
    %v1256 = vpack.c.b16 %v872, %v864
    %v1257 = vpack.c.b16 %v873, %v865
    %v1258 = vpack.c.b16 %v874, %v866
    %v1259 = vpack.c.b16 %v883, %v875
    %v1260 = vpack.c.b16 %v884, %v876
    %v1261 = vpack.c.b16 %v885, %v877
    %v1262 = vpack.c.b16 %v886, %v878
    %v1263 = vpack.c.b16 %v887, %v879
    %v1264 = vpack.c.b16 %v888, %v880
    %v1265 = vpack.c.b16 %v889, %v881
    %v1266 = vpack.c.b16 %v890, %v882
    %v1267 = vpack.c.b16 %v899, %v891
    %v1268 = vpack.c.b16 %v900, %v892
    %v1269 = vpack.c.b16 %v901, %v893
    %v1270 = vpack.c.b16 %v902, %v894
    %v1271 = vpack.c.b16 %v903, %v895
    %v1272 = vpack.c.b16 %v904, %v896
    %v1273 = vpack.c.b16 %v905, %v897
    %v1274 = vpack.c.b16 %v906, %v898
    %v1275 = vpack.c.b16 %v915, %v907
    %v1276 = vpack.c.b16 %v916, %v908
    %v1277 = vpack.c.b16 %v917, %v909
    %v1278 = vpack.c.b16 %v918, %v910
    %v1279 = vpack.c.b16 %v919, %v911
    %v1280 = vpack.c.b16 %v920, %v912
    %v1281 = vpack.c.b16 %v921, %v913
    %v1282 = vpack.c.b16 %v922, %v914
    %v1283 = vpack.c.b16 %v931, %v923
    %v1284 = vpack.c.b16 %v932, %v924
    %v1285 = vpack.c.b16 %v933, %v925
    %v1286 = vpack.c.b16 %v934, %v926
    %v1287 = vpack.c.b16 %v935, %v927
    %v1288 = vpack.c.b16 %v936, %v928
    %v1289 = vpack.c.b16 %v937, %v929
    %v1290 = vpack.c.b16 %v938, %v930
    %v1291 = vpack.c.b16 %v947, %v939
    %v1292 = vpack.c.b16 %v948, %v940
    %v1293 = vpack.c.b16 %v949, %v941
    %v1294 = vpack.c.b16 %v950, %v942
    %v1295 = vpack.c.b16 %v951, %v943
    %v1296 = vpack.c.b16 %v952, %v944
    %v1297 = vpack.c.b16 %v953, %v945
    %v1298 = vpack.c.b16 %v954, %v946
    %v1299 = vpack.c.b16 %v963, %v955
    %v1300 = vpack.c.b16 %v964, %v956
    %v1301 = vpack.c.b16 %v965, %v957
    %v1302 = vpack.c.b16 %v966, %v958
    %v1303 = vpack.c.b16 %v967, %v959
    %v1304 = vpack.c.b16 %v968, %v960
    %v1305 = vpack.c.b16 %v969, %v961
    %v1306 = vpack.c.b16 %v970, %v962
    %v1307 = vpack.c.b16 %v979, %v971
    %v1308 = vpack.c.b16 %v980, %v972
    %v1309 = vpack.c.b16 %v981, %v973
    %v1310 = vpack.c.b16 %v982, %v974
    %v1311 = vpack.c.b16 %v983, %v975
    %v1312 = vpack.c.b16 %v984, %v976
    %v1313 = vpack.c.b16 %v985, %v977
    %v1314 = vpack.c.b16 %v986, %v978
    %v1315 = vpack.c.b16 %v995, %v987
    %v1316 = vpack.c.b16 %v996, %v988
    %v1317 = vpack.c.b16 %v997, %v989
    %v1318 = vpack.c.b16 %v998, %v990
    %v1319 = vpack.c.b16 %v999, %v991
    %v1320 = vpack.c.b16 %v1000, %v992
    %v1321 = vpack.c.b16 %v1001, %v993
    %v1322 = vpack.c.b16 %v1002, %v994
    %v1323 = vpack.c.b16 %v1011, %v1003
    %v1324 = vpack.c.b16 %v1012, %v1004
    %v1325 = vpack.c.b16 %v1013, %v1005
    %v1326 = vpack.c.b16 %v1014, %v1006
    %v1327 = vpack.c.b16 %v1015, %v1007
    %v1328 = vpack.c.b16 %v1016, %v1008
    %v1329 = vpack.c.b16 %v1017, %v1009
    %v1330 = vpack.c.b16 %v1018, %v1010
    %v1331 = vpack.c.b16 %v1027, %v1019
    %v1332 = vpack.c.b16 %v1028, %v1020
    %v1333 = vpack.c.b16 %v1029, %v1021
    %v1334 = vpack.c.b16 %v1030, %v1022
    %v1335 = vpack.c.b16 %v1031, %v1023
    %v1336 = vpack.c.b16 %v1032, %v1024
    %v1337 = vpack.c.b16 %v1033, %v1025
    %v1338 = vpack.c.b16 %v1034, %v1026
    %v1339 = vpack.c.b16 %v1043, %v1035
    %v1340 = vpack.c.b16 %v1044, %v1036
    %v1341 = vpack.c.b16 %v1045, %v1037
    %v1342 = vpack.c.b16 %v1046, %v1038
    %v1343 = vpack.c.b16 %v1047, %v1039
    %v1344 = vpack.c.b16 %v1048, %v1040
    %v1345 = vpack.c.b16 %v1049, %v1041
    %v1346 = vpack.c.b16 %v1050, %v1042
    %v1347 = vpack.c.b16 %v1059, %v1051
    %v1348 = vpack.c.b16 %v1060, %v1052
    %v1349 = vpack.c.b16 %v1061, %v1053
    %v1350 = vpack.c.b16 %v1062, %v1054
    %v1351 = vpack.c.b16 %v1063, %v1055
    %v1352 = vpack.c.b16 %v1064, %v1056
    %v1353 = vpack.c.b16 %v1065, %v1057
    %v1354 = vpack.c.b16 %v1066, %v1058
    %v1355 = vpack.c.b16 %v1075, %v1067
    %v1356 = vpack.c.b16 %v1076, %v1068
    %v1357 = vpack.c.b16 %v1077, %v1069
    %v1358 = vpack.c.b16 %v1078, %v1070
    %v1359 = vpack.c.b16 %v1079, %v1071
    %v1360 = vpack.c.b16 %v1080, %v1072
    %v1361 = vpack.c.b16 %v1081, %v1073
    %v1362 = vpack.c.b16 %v1082, %v1074
    %v1363 = vpack.c.b16 %v1091, %v1083
    %v1364 = vpack.c.b16 %v1092, %v1084
    %v1365 = vpack.c.b16 %v1093, %v1085
    %v1366 = vpack.c.b16 %v1094, %v1086
    %v1367 = vpack.c.b16 %v1095, %v1087
    %v1368 = vpack.c.b16 %v1096, %v1088
    %v1369 = vpack.c.b16 %v1097, %v1089
    %v1370 = vpack.c.b16 %v1098, %v1090
    %v1371 = vpack.c.b16 %v1107, %v1099
    %v1372 = vpack.c.b16 %v1108, %v1100
    %v1373 = vpack.c.b16 %v1109, %v1101
    %v1374 = vpack.c.b16 %v1110, %v1102
    %v1375 = vpack.c.b16 %v1111, %v1103
    %v1376 = vpack.c.b16 %v1112, %v1104
    %v1377 = vpack.c.b16 %v1113, %v1105
    %v1378 = vpack.c.b16 %v1114, %v1106
    %v1379 = vpack.c.b16 %v1123, %v1115
    %v1380 = vpack.c.b16 %v1124, %v1116
    %v1381 = vpack.c.b16 %v1125, %v1117
    %v1382 = vpack.c.b16 %v1126, %v1118
    %v1383 = vpack.c.b16 %v1127, %v1119
    %v1384 = vpack.c.b16 %v1128, %v1120
    %v1385 = vpack.c.b16 %v1129, %v1121
    %v1386 = vpack.c.b16 %v1130, %v1122
    %1643 = vmatprep.subr.bf16.mxu0 %v1188
    %1644 = vmatpush1.bf16.msra.mxu0 %v1187
    %1645 = vmatprep.subr.bf16.mxu0 %v1180
    %1646 = vmatpush1.bf16.msra.mxu0 %v1179
    %1647 = vmatprep.subr.bf16.mxu0 %v1172
    %1648 = vmatpush1.bf16.msra.mxu0 %v1171
    %1649 = vmatprep.subr.bf16.mxu0 %v1164
    %1650 = vmatpush1.bf16.msra.mxu0 %v1163
    %1651 = vmatprep.subr.bf16.mxu0 %v1156
    %1652 = vmatpush1.bf16.msra.mxu0 %v1155
    %1653 = vmatprep.subr.bf16.mxu0 %v1148
    %1654 = vmatpush1.bf16.msra.mxu0 %v1147
    %1655 = vmatprep.subr.bf16.mxu0 %v1140
    %1656 = vmatpush1.bf16.msra.mxu0 %v1139
    %1657 = vmatprep.subr.bf16.mxu0 %v1132
    %1658 = vmatpush1.bf16.msra.mxu0 %v1131
    %1659 = vmatprep.subr.bf16.mxu0 %v1252
    %1660 = vmatpush2.bf16.msra.mxu0 %v1251
    %1661 = vmatprep.subr.bf16.mxu0 %v1244
    %1662 = vmatpush2.bf16.msra.mxu0 %v1243
    %1663 = vmatprep.subr.bf16.mxu0 %v1236
    %1664 = vmatpush2.bf16.msra.mxu0 %v1235
    %1665 = vmatprep.subr.bf16.mxu0 %v1228
    %1666 = vmatpush2.bf16.msra.mxu0 %v1227
    %1667 = vmatprep.subr.bf16.mxu0 %v1220
    %1668 = vmatpush2.bf16.msra.mxu0 %v1219
    %1669 = vmatprep.subr.bf16.mxu0 %v1212
    %1670 = vmatpush2.bf16.msra.mxu0 %v1211
    %1671 = vmatprep.subr.bf16.mxu0 %v1204
    %1672 = vmatpush2.bf16.msra.mxu0 %v1203
    %1673 = vmatprep.subr.bf16.mxu0 %v1196
    %1674 = vmatpush2.bf16.msra.mxu0 %v1195
    %1675 = vmatprep.mubr.bf16.mxu0 %v104
    %1676 = vmatmul.mubr.bf16.gmra.mxu0 %v103
    %v1677 = vpop.f32.mrf.mxu0
    %v1678 = vadd.f32 0.0, %v1677
    %v1679 = vpop.f32.mrf.mxu0
    %v1680 = vadd.f32 0.0, %v1679
    %v1681 = vpop.f32.mrf.mxu0
    %v1682 = vadd.f32 0.0, %v1681
    %v1683 = vpop.f32.mrf.mxu0
    %v1684 = vadd.f32 0.0, %v1683
    %1685 = vdwg.mxu0
    %1686 = vmatprep.subr.bf16.mxu0 %v1316
    %1687 = vmatpush1.bf16.msra.mxu0 %v1315
    %1688 = vmatprep.subr.bf16.mxu0 %v1308
    %1689 = vmatpush1.bf16.msra.mxu0 %v1307
    %1690 = vmatprep.subr.bf16.mxu0 %v1300
    %1691 = vmatpush1.bf16.msra.mxu0 %v1299
    %1692 = vmatprep.subr.bf16.mxu0 %v1292
    %1693 = vmatpush1.bf16.msra.mxu0 %v1291
    %1694 = vmatprep.subr.bf16.mxu0 %v1284
    %1695 = vmatpush1.bf16.msra.mxu0 %v1283
    %1696 = vmatprep.subr.bf16.mxu0 %v1276
    %1697 = vmatpush1.bf16.msra.mxu0 %v1275
    %1698 = vmatprep.subr.bf16.mxu0 %v1268
    %1699 = vmatpush1.bf16.msra.mxu0 %v1267
    %1700 = vmatprep.subr.bf16.mxu0 %v1260
    %1701 = vmatpush1.bf16.msra.mxu0 %v1259
    %1702 = vmatprep.subr.bf16.mxu0 %v1380
    %1703 = vmatpush2.bf16.msra.mxu0 %v1379
    %1704 = vmatprep.subr.bf16.mxu0 %v1372
    %1705 = vmatpush2.bf16.msra.mxu0 %v1371
    %1706 = vmatprep.subr.bf16.mxu0 %v1364
    %1707 = vmatpush2.bf16.msra.mxu0 %v1363
    %1708 = vmatprep.subr.bf16.mxu0 %v1356
    %1709 = vmatpush2.bf16.msra.mxu0 %v1355
    %1710 = vmatprep.subr.bf16.mxu0 %v1348
    %1711 = vmatpush2.bf16.msra.mxu0 %v1347
    %1712 = vmatprep.subr.bf16.mxu0 %v1340
    %1713 = vmatpush2.bf16.msra.mxu0 %v1339
    %1714 = vmatprep.subr.bf16.mxu0 %v1332
    %1715 = vmatpush2.bf16.msra.mxu0 %v1331
    %1716 = vmatprep.subr.bf16.mxu0 %v1324
    %1717 = vmatpush2.bf16.msra.mxu0 %v1323
    %1718 = vmatprep.mubr.bf16.mxu0 %v106
    %1719 = vmatmul.mubr.bf16.gmra.mxu0 %v105
    %v1720 = vpop.f32.mrf.mxu0
    %v1721 = vadd.f32 %v1678, %v1720
    %v1722 = vpop.f32.mrf.mxu0
    %v1723 = vadd.f32 %v1680, %v1722
    %v1724 = vpop.f32.mrf.mxu0
    %v1725 = vadd.f32 %v1682, %v1724
    %v1726 = vpop.f32.mrf.mxu0
    %v1727 = vadd.f32 %v1684, %v1726
    %1728 = vdwg.mxu0
    %1729 = vmatprep.subr.bf16.mxu0 %v1190
    %1730 = vmatpush1.bf16.msra.mxu0 %v1189
    %1731 = vmatprep.subr.bf16.mxu0 %v1182
    %1732 = vmatpush1.bf16.msra.mxu0 %v1181
    %1733 = vmatprep.subr.bf16.mxu0 %v1174
    %1734 = vmatpush1.bf16.msra.mxu0 %v1173
    %1735 = vmatprep.subr.bf16.mxu0 %v1166
    %1736 = vmatpush1.bf16.msra.mxu0 %v1165
    %1737 = vmatprep.subr.bf16.mxu0 %v1158
    %1738 = vmatpush1.bf16.msra.mxu0 %v1157
    %1739 = vmatprep.subr.bf16.mxu0 %v1150
    %1740 = vmatpush1.bf16.msra.mxu0 %v1149
    %1741 = vmatprep.subr.bf16.mxu0 %v1142
    %1742 = vmatpush1.bf16.msra.mxu0 %v1141
    %1743 = vmatprep.subr.bf16.mxu0 %v1134
    %1744 = vmatpush1.bf16.msra.mxu0 %v1133
    %1745 = vmatprep.subr.bf16.mxu0 %v1254
    %1746 = vmatpush2.bf16.msra.mxu0 %v1253
    %1747 = vmatprep.subr.bf16.mxu0 %v1246
    %1748 = vmatpush2.bf16.msra.mxu0 %v1245
    %1749 = vmatprep.subr.bf16.mxu0 %v1238
    %1750 = vmatpush2.bf16.msra.mxu0 %v1237
    %1751 = vmatprep.subr.bf16.mxu0 %v1230
    %1752 = vmatpush2.bf16.msra.mxu0 %v1229
    %1753 = vmatprep.subr.bf16.mxu0 %v1222
    %1754 = vmatpush2.bf16.msra.mxu0 %v1221
    %1755 = vmatprep.subr.bf16.mxu0 %v1214
    %1756 = vmatpush2.bf16.msra.mxu0 %v1213
    %1757 = vmatprep.subr.bf16.mxu0 %v1206
    %1758 = vmatpush2.bf16.msra.mxu0 %v1205
    %1759 = vmatprep.subr.bf16.mxu0 %v1198
    %1760 = vmatpush2.bf16.msra.mxu0 %v1197
    %1761 = vmatprep.mubr.bf16.mxu0 %v104
    %1762 = vmatmul.mubr.bf16.gmra.mxu0 %v103
    %v1763 = vpop.f32.mrf.mxu0
    %v1764 = vadd.f32 0.0, %v1763
    %v1765 = vpop.f32.mrf.mxu0
    %v1766 = vadd.f32 0.0, %v1765
    %v1767 = vpop.f32.mrf.mxu0
    %v1768 = vadd.f32 0.0, %v1767
    %v1769 = vpop.f32.mrf.mxu0
    %v1770 = vadd.f32 0.0, %v1769
    %1771 = vdwg.mxu0
    %1772 = vmatprep.subr.bf16.mxu0 %v1318
    %1773 = vmatpush1.bf16.msra.mxu0 %v1317
    %1774 = vmatprep.subr.bf16.mxu0 %v1310
    %1775 = vmatpush1.bf16.msra.mxu0 %v1309
    %1776 = vmatprep.subr.bf16.mxu0 %v1302
    %1777 = vmatpush1.bf16.msra.mxu0 %v1301
    %1778 = vmatprep.subr.bf16.mxu0 %v1294
    %1779 = vmatpush1.bf16.msra.mxu0 %v1293
    %1780 = vmatprep.subr.bf16.mxu0 %v1286
    %1781 = vmatpush1.bf16.msra.mxu0 %v1285
    %1782 = vmatprep.subr.bf16.mxu0 %v1278
    %1783 = vmatpush1.bf16.msra.mxu0 %v1277
    %1784 = vmatprep.subr.bf16.mxu0 %v1270
    %1785 = vmatpush1.bf16.msra.mxu0 %v1269
    %1786 = vmatprep.subr.bf16.mxu0 %v1262
    %1787 = vmatpush1.bf16.msra.mxu0 %v1261
    %1788 = vmatprep.subr.bf16.mxu0 %v1382
    %1789 = vmatpush2.bf16.msra.mxu0 %v1381
    %1790 = vmatprep.subr.bf16.mxu0 %v1374
    %1791 = vmatpush2.bf16.msra.mxu0 %v1373
    %1792 = vmatprep.subr.bf16.mxu0 %v1366
    %1793 = vmatpush2.bf16.msra.mxu0 %v1365
    %1794 = vmatprep.subr.bf16.mxu0 %v1358
    %1795 = vmatpush2.bf16.msra.mxu0 %v1357
    %1796 = vmatprep.subr.bf16.mxu0 %v1350
    %1797 = vmatpush2.bf16.msra.mxu0 %v1349
    %1798 = vmatprep.subr.bf16.mxu0 %v1342
    %1799 = vmatpush2.bf16.msra.mxu0 %v1341
    %1800 = vmatprep.subr.bf16.mxu0 %v1334
    %1801 = vmatpush2.bf16.msra.mxu0 %v1333
    %1802 = vmatprep.subr.bf16.mxu0 %v1326
    %1803 = vmatpush2.bf16.msra.mxu0 %v1325
    %1804 = vmatprep.mubr.bf16.mxu0 %v106
    %1805 = vmatmul.mubr.bf16.gmra.mxu0 %v105
    %v1806 = vpop.f32.mrf.mxu0
    %v1807 = vadd.f32 %v1764, %v1806
    %v1808 = vpop.f32.mrf.mxu0
    %v1809 = vadd.f32 %v1766, %v1808
    %v1810 = vpop.f32.mrf.mxu0
    %v1811 = vadd.f32 %v1768, %v1810
    %v1812 = vpop.f32.mrf.mxu0
    %v1813 = vadd.f32 %v1770, %v1812
    %1814 = vdwg.mxu0
    %1815 = vmatprep.subr.bf16.mxu0 %v1192
    %1816 = vmatpush1.bf16.msra.mxu0 %v1191
    %1817 = vmatprep.subr.bf16.mxu0 %v1184
    %1818 = vmatpush1.bf16.msra.mxu0 %v1183
    %1819 = vmatprep.subr.bf16.mxu0 %v1176
    %1820 = vmatpush1.bf16.msra.mxu0 %v1175
    %1821 = vmatprep.subr.bf16.mxu0 %v1168
    %1822 = vmatpush1.bf16.msra.mxu0 %v1167
    %1823 = vmatprep.subr.bf16.mxu0 %v1160
    %1824 = vmatpush1.bf16.msra.mxu0 %v1159
    %1825 = vmatprep.subr.bf16.mxu0 %v1152
    %1826 = vmatpush1.bf16.msra.mxu0 %v1151
    %1827 = vmatprep.subr.bf16.mxu0 %v1144
    %1828 = vmatpush1.bf16.msra.mxu0 %v1143
    %1829 = vmatprep.subr.bf16.mxu0 %v1136
    %1830 = vmatpush1.bf16.msra.mxu0 %v1135
    %1831 = vmatprep.subr.bf16.mxu0 %v1256
    %1832 = vmatpush2.bf16.msra.mxu0 %v1255
    %1833 = vmatprep.subr.bf16.mxu0 %v1248
    %1834 = vmatpush2.bf16.msra.mxu0 %v1247
    %1835 = vmatprep.subr.bf16.mxu0 %v1240
    %1836 = vmatpush2.bf16.msra.mxu0 %v1239
    %1837 = vmatprep.subr.bf16.mxu0 %v1232
    %1838 = vmatpush2.bf16.msra.mxu0 %v1231
    %1839 = vmatprep.subr.bf16.mxu0 %v1224
    %1840 = vmatpush2.bf16.msra.mxu0 %v1223
    %1841 = vmatprep.subr.bf16.mxu0 %v1216
    %1842 = vmatpush2.bf16.msra.mxu0 %v1215
    %1843 = vmatprep.subr.bf16.mxu0 %v1208
    %1844 = vmatpush2.bf16.msra.mxu0 %v1207
    %1845 = vmatprep.subr.bf16.mxu0 %v1200
    %1846 = vmatpush2.bf16.msra.mxu0 %v1199
    %1847 = vmatprep.mubr.bf16.mxu0 %v104
    %1848 = vmatmul.mubr.bf16.gmra.mxu0 %v103
    %v1849 = vpop.f32.mrf.mxu0
    %v1850 = vadd.f32 0.0, %v1849
    %v1851 = vpop.f32.mrf.mxu0
    %v1852 = vadd.f32 0.0, %v1851
    %v1853 = vpop.f32.mrf.mxu0
    %v1854 = vadd.f32 0.0, %v1853
    %v1855 = vpop.f32.mrf.mxu0
    %v1856 = vadd.f32 0.0, %v1855
    %1857 = vdwg.mxu0
    %1858 = vmatprep.subr.bf16.mxu0 %v1320
    %1859 = vmatpush1.bf16.msra.mxu0 %v1319
    %1860 = vmatprep.subr.bf16.mxu0 %v1312
    %1861 = vmatpush1.bf16.msra.mxu0 %v1311
    %1862 = vmatprep.subr.bf16.mxu0 %v1304
    %1863 = vmatpush1.bf16.msra.mxu0 %v1303
    %1864 = vmatprep.subr.bf16.mxu0 %v1296
    %1865 = vmatpush1.bf16.msra.mxu0 %v1295
    %1866 = vmatprep.subr.bf16.mxu0 %v1288
    %1867 = vmatpush1.bf16.msra.mxu0 %v1287
    %1868 = vmatprep.subr.bf16.mxu0 %v1280
    %1869 = vmatpush1.bf16.msra.mxu0 %v1279
    %1870 = vmatprep.subr.bf16.mxu0 %v1272
    %1871 = vmatpush1.bf16.msra.mxu0 %v1271
    %1872 = vmatprep.subr.bf16.mxu0 %v1264
    %1873 = vmatpush1.bf16.msra.mxu0 %v1263
    %1874 = vmatprep.subr.bf16.mxu0 %v1384
    %1875 = vmatpush2.bf16.msra.mxu0 %v1383
    %1876 = vmatprep.subr.bf16.mxu0 %v1376
    %1877 = vmatpush2.bf16.msra.mxu0 %v1375
    %1878 = vmatprep.subr.bf16.mxu0 %v1368
    %1879 = vmatpush2.bf16.msra.mxu0 %v1367
    %1880 = vmatprep.subr.bf16.mxu0 %v1360
    %1881 = vmatpush2.bf16.msra.mxu0 %v1359
    %1882 = vmatprep.subr.bf16.mxu0 %v1352
    %1883 = vmatpush2.bf16.msra.mxu0 %v1351
    %1884 = vmatprep.subr.bf16.mxu0 %v1344
    %1885 = vmatpush2.bf16.msra.mxu0 %v1343
    %1886 = vmatprep.subr.bf16.mxu0 %v1336
    %1887 = vmatpush2.bf16.msra.mxu0 %v1335
    %1888 = vmatprep.subr.bf16.mxu0 %v1328
    %1889 = vmatpush2.bf16.msra.mxu0 %v1327
    %1890 = vmatprep.mubr.bf16.mxu0 %v106
    %1891 = vmatmul.mubr.bf16.gmra.mxu0 %v105
    %v1892 = vpop.f32.mrf.mxu0
    %v1893 = vadd.f32 %v1850, %v1892
    %v1894 = vpop.f32.mrf.mxu0
    %v1895 = vadd.f32 %v1852, %v1894
    %v1896 = vpop.f32.mrf.mxu0
    %v1897 = vadd.f32 %v1854, %v1896
    %v1898 = vpop.f32.mrf.mxu0
    %v1899 = vadd.f32 %v1856, %v1898
    %1900 = vdwg.mxu0
    %1901 = vmatprep.subr.bf16.mxu0 %v1194
    %1902 = vmatpush1.bf16.msra.mxu0 %v1193
    %1903 = vmatprep.subr.bf16.mxu0 %v1186
    %1904 = vmatpush1.bf16.msra.mxu0 %v1185
    %1905 = vmatprep.subr.bf16.mxu0 %v1178
    %1906 = vmatpush1.bf16.msra.mxu0 %v1177
    %1907 = vmatprep.subr.bf16.mxu0 %v1170
    %1908 = vmatpush1.bf16.msra.mxu0 %v1169
    %1909 = vmatprep.subr.bf16.mxu0 %v1162
    %1910 = vmatpush1.bf16.msra.mxu0 %v1161
    %1911 = vmatprep.subr.bf16.mxu0 %v1154
    %1912 = vmatpush1.bf16.msra.mxu0 %v1153
    %1913 = vmatprep.subr.bf16.mxu0 %v1146
    %1914 = vmatpush1.bf16.msra.mxu0 %v1145
    %1915 = vmatprep.subr.bf16.mxu0 %v1138
    %1916 = vmatpush1.bf16.msra.mxu0 %v1137
    %1917 = vmatprep.subr.bf16.mxu0 %v1258
    %1918 = vmatpush2.bf16.msra.mxu0 %v1257
    %1919 = vmatprep.subr.bf16.mxu0 %v1250
    %1920 = vmatpush2.bf16.msra.mxu0 %v1249
    %1921 = vmatprep.subr.bf16.mxu0 %v1242
    %1922 = vmatpush2.bf16.msra.mxu0 %v1241
    %1923 = vmatprep.subr.bf16.mxu0 %v1234
    %1924 = vmatpush2.bf16.msra.mxu0 %v1233
    %1925 = vmatprep.subr.bf16.mxu0 %v1226
    %1926 = vmatpush2.bf16.msra.mxu0 %v1225
    %1927 = vmatprep.subr.bf16.mxu0 %v1218
    %1928 = vmatpush2.bf16.msra.mxu0 %v1217
    %1929 = vmatprep.subr.bf16.mxu0 %v1210
    %1930 = vmatpush2.bf16.msra.mxu0 %v1209
    %1931 = vmatprep.subr.bf16.mxu0 %v1202
    %1932 = vmatpush2.bf16.msra.mxu0 %v1201
    %1933 = vmatprep.mubr.bf16.mxu0 %v104
    %1934 = vmatmul.mubr.bf16.gmra.mxu0 %v103
    %v1935 = vpop.f32.mrf.mxu0
    %v1936 = vadd.f32 0.0, %v1935
    %v1937 = vpop.f32.mrf.mxu0
    %v1938 = vadd.f32 0.0, %v1937
    %v1939 = vpop.f32.mrf.mxu0
    %v1940 = vadd.f32 0.0, %v1939
    %v1941 = vpop.f32.mrf.mxu0
    %v1942 = vadd.f32 0.0, %v1941
    %1943 = vdwg.mxu0
    %1944 = vmatprep.subr.bf16.mxu0 %v1322
    %1945 = vmatpush1.bf16.msra.mxu0 %v1321
    %1946 = vmatprep.subr.bf16.mxu0 %v1314
    %1947 = vmatpush1.bf16.msra.mxu0 %v1313
    %1948 = vmatprep.subr.bf16.mxu0 %v1306
    %1949 = vmatpush1.bf16.msra.mxu0 %v1305
    %1950 = vmatprep.subr.bf16.mxu0 %v1298
    %1951 = vmatpush1.bf16.msra.mxu0 %v1297
    %1952 = vmatprep.subr.bf16.mxu0 %v1290
    %1953 = vmatpush1.bf16.msra.mxu0 %v1289
    %1954 = vmatprep.subr.bf16.mxu0 %v1282
    %1955 = vmatpush1.bf16.msra.mxu0 %v1281
    %1956 = vmatprep.subr.bf16.mxu0 %v1274
    %1957 = vmatpush1.bf16.msra.mxu0 %v1273
    %1958 = vmatprep.subr.bf16.mxu0 %v1266
    %1959 = vmatpush1.bf16.msra.mxu0 %v1265
    %1960 = vmatprep.subr.bf16.mxu0 %v1386
    %1961 = vmatpush2.bf16.msra.mxu0 %v1385
    %1962 = vmatprep.subr.bf16.mxu0 %v1378
    %1963 = vmatpush2.bf16.msra.mxu0 %v1377
    %1964 = vmatprep.subr.bf16.mxu0 %v1370
    %1965 = vmatpush2.bf16.msra.mxu0 %v1369
    %1966 = vmatprep.subr.bf16.mxu0 %v1362
    %1967 = vmatpush2.bf16.msra.mxu0 %v1361
    %1968 = vmatprep.subr.bf16.mxu0 %v1354
    %1969 = vmatpush2.bf16.msra.mxu0 %v1353
    %1970 = vmatprep.subr.bf16.mxu0 %v1346
    %1971 = vmatpush2.bf16.msra.mxu0 %v1345
    %1972 = vmatprep.subr.bf16.mxu0 %v1338
    %1973 = vmatpush2.bf16.msra.mxu0 %v1337
    %1974 = vmatprep.subr.bf16.mxu0 %v1330
    %1975 = vmatpush2.bf16.msra.mxu0 %v1329
    %1976 = vmatprep.mubr.bf16.mxu0 %v106
    %1977 = vmatmul.mubr.bf16.gmra.mxu0 %v105
    %v1978 = vpop.f32.mrf.mxu0
    %v1979 = vadd.f32 %v1936, %v1978
    %v1980 = vpop.f32.mrf.mxu0
    %v1981 = vadd.f32 %v1938, %v1980
    %v1982 = vpop.f32.mrf.mxu0
    %v1983 = vadd.f32 %v1940, %v1982
    %v1984 = vpop.f32.mrf.mxu0
    %v1985 = vadd.f32 %v1942, %v1984
    %1986 = vdwg.mxu0
    %p1987 = scmp.eq.s32.totalorder 0, 0
    // Predicated region
    $region38: #{_scsmd_forward_impl.1} parent=1 // pred_check
      %p1988 = pneg %p1987
    $region39: #{_scsmd_forward_impl.1} parent=1 // pred_check_branch
      %1990 = sbr.rel (%p1988) target = $region41
    $region40: #{_scsmd_forward_impl.1} parent=1 // pred_region
      %1991 = vst [vmem:[#allocation2] sm:$0xff] %v1721
      %1992 = vst [vmem:[#allocation2 + $0x8] sm:$0xff] %v1723
      %1993 = vst [vmem:[#allocation2 + $0x10] sm:$0xff] %v1807
      %1994 = vst [vmem:[#allocation2 + $0x18] sm:$0xff] %v1809
      %1995 = vst [vmem:[#allocation2 + $0x20] sm:$0xff] %v1893
      %1996 = vst [vmem:[#allocation2 + $0x28] sm:$0xff] %v1895
      %1997 = vst [vmem:[#allocation2 + $0x30] sm:$0xff] %v1979
      %1998 = vst [vmem:[#allocation2 + $0x38] sm:$0xff] %v1981
      %1999 = vst [vmem:[#allocation2 + $0x40] sm:$0xff] %v1725
      %2000 = vst [vmem:[#allocation2 + $0x48] sm:$0xff] %v1727
      %2001 = vst [vmem:[#allocation2 + $0x50] sm:$0xff] %v1811
      %2002 = vst [vmem:[#allocation2 + $0x58] sm:$0xff] %v1813
      %2003 = vst [vmem:[#allocation2 + $0x60] sm:$0xff] %v1897
      %2004 = vst [vmem:[#allocation2 + $0x68] sm:$0xff] %v1899
      %2005 = vst [vmem:[#allocation2 + $0x70] sm:$0xff] %v1983
      %2006 = vst [vmem:[#allocation2 + $0x78] sm:$0xff] %v1985
    $region41: #{_scsmd_forward_impl.1} parent=1 // pred_fallthru
      _
    %p2007 = scmp.gt.s32.totalorder 0, 0
    // Predicated region
    $region42: #{_scsmd_forward_impl.1} parent=1 // pred_check
      %p2008 = pneg %p2007
    $region43: #{_scsmd_forward_impl.1} parent=1 // pred_check_branch
      %2010 = sbr.rel (%p2008) target = $region45
    $region44: #{_scsmd_forward_impl.1} parent=1 // pred_region
      %v2011 = vld [vmem:[#allocation2] sm:$0xff]
      %v2012 = vld [vmem:[#allocation2 + $0x8] sm:$0xff]
      %v2013 = vld [vmem:[#allocation2 + $0x10] sm:$0xff]
      %v2014 = vld [vmem:[#allocation2 + $0x18] sm:$0xff]
      %v2015 = vld [vmem:[#allocation2 + $0x20] sm:$0xff]
      %v2016 = vld [vmem:[#allocation2 + $0x28] sm:$0xff]
      %v2017 = vld [vmem:[#allocation2 + $0x30] sm:$0xff]
      %v2018 = vld [vmem:[#allocation2 + $0x38] sm:$0xff]
      %v2019 = vld [vmem:[#allocation2 + $0x40] sm:$0xff]
      %v2020 = vld [vmem:[#allocation2 + $0x48] sm:$0xff]
      %v2021 = vld [vmem:[#allocation2 + $0x50] sm:$0xff]
      %v2022 = vld [vmem:[#allocation2 + $0x58] sm:$0xff]
      %v2023 = vld [vmem:[#allocation2 + $0x60] sm:$0xff]
      %v2024 = vld [vmem:[#allocation2 + $0x68] sm:$0xff]
      %v2025 = vld [vmem:[#allocation2 + $0x70] sm:$0xff]
      %v2026 = vld [vmem:[#allocation2 + $0x78] sm:$0xff]
      %v2027 = vadd.f32 %v2011, %v1721
      %v2028 = vadd.f32 %v2012, %v1723
      %v2029 = vadd.f32 %v2013, %v1807
      %v2030 = vadd.f32 %v2014, %v1809
      %v2031 = vadd.f32 %v2015, %v1893
      %v2032 = vadd.f32 %v2016, %v1895
      %v2033 = vadd.f32 %v2017, %v1979
      %v2034 = vadd.f32 %v2018, %v1981
      %v2035 = vadd.f32 %v2019, %v1725
      %v2036 = vadd.f32 %v2020, %v1727
      %v2037 = vadd.f32 %v2021, %v1811
      %v2038 = vadd.f32 %v2022, %v1813
      %v2039 = vadd.f32 %v2023, %v1897
      %v2040 = vadd.f32 %v2024, %v1899
      %v2041 = vadd.f32 %v2025, %v1983
      %v2042 = vadd.f32 %v2026, %v1985
      %2043 = vst [vmem:[#allocation2] sm:$0xff] %v2027
      %2044 = vst [vmem:[#allocation2 + $0x8] sm:$0xff] %v2028
      %2045 = vst [vmem:[#allocation2 + $0x10] sm:$0xff] %v2029
      %2046 = vst [vmem:[#allocation2 + $0x18] sm:$0xff] %v2030
      %2047 = vst [vmem:[#allocation2 + $0x20] sm:$0xff] %v2031
      %2048 = vst [vmem:[#allocation2 + $0x28] sm:$0xff] %v2032
      %2049 = vst [vmem:[#allocation2 + $0x30] sm:$0xff] %v2033
      %2050 = vst [vmem:[#allocation2 + $0x38] sm:$0xff] %v2034
      %2051 = vst [vmem:[#allocation2 + $0x40] sm:$0xff] %v2035
      %2052 = vst [vmem:[#allocation2 + $0x48] sm:$0xff] %v2036
      %2053 = vst [vmem:[#allocation2 + $0x50] sm:$0xff] %v2037
      %2054 = vst [vmem:[#allocation2 + $0x58] sm:$0xff] %v2038
      %2055 = vst [vmem:[#allocation2 + $0x60] sm:$0xff] %v2039
      %2056 = vst [vmem:[#allocation2 + $0x68] sm:$0xff] %v2040
      %2057 = vst [vmem:[#allocation2 + $0x70] sm:$0xff] %v2041
      %2058 = vst [vmem:[#allocation2 + $0x78] sm:$0xff] %v2042
    $region45: #{_scsmd_forward_impl.1} parent=1 // pred_fallthru
      _
    // Predicated region
    $region46: #{_scsmd_forward_impl.1} parent=1 // pred_check
      %p2059 = pneg %p1987
    $region47: #{_scsmd_forward_impl.1} parent=1 // pred_check_branch
      %2061 = sbr.rel (%p2059) target = $region49
    $region48: #{_scsmd_forward_impl.1} parent=1 // pred_region
      %v2062 = vld [vmem:[#allocation2] sm:$0xff]
      %v2063 = vld [vmem:[#allocation2 + $0x8] sm:$0xff]
      %v2064 = vld [vmem:[#allocation2 + $0x10] sm:$0xff]
      %v2065 = vld [vmem:[#allocation2 + $0x18] sm:$0xff]
      %v2066 = vld [vmem:[#allocation2 + $0x20] sm:$0xff]
      %v2067 = vld [vmem:[#allocation2 + $0x28] sm:$0xff]
      %v2068 = vld [vmem:[#allocation2 + $0x30] sm:$0xff]
      %v2069 = vld [vmem:[#allocation2 + $0x38] sm:$0xff]
      %v2070 = vld [vmem:[#allocation2 + $0x40] sm:$0xff]
      %v2071 = vld [vmem:[#allocation2 + $0x48] sm:$0xff]
      %v2072 = vld [vmem:[#allocation2 + $0x50] sm:$0xff]
      %v2073 = vld [vmem:[#allocation2 + $0x58] sm:$0xff]
      %v2074 = vld [vmem:[#allocation2 + $0x60] sm:$0xff]
      %v2075 = vld [vmem:[#allocation2 + $0x68] sm:$0xff]
      %v2076 = vld [vmem:[#allocation2 + $0x70] sm:$0xff]
      %v2077 = vld [vmem:[#allocation2 + $0x78] sm:$0xff]
      %v2078 = vld [vmem:[#allocation8] sm:$0xff]
      %v2080 = vlaneseq
      %v2081 = vshrl.u32 %v2080, 7
      %v2082 = vsub.s32 0, %v2081
      %v2083 = vrot.slane %v2078, %v2082
      %v2084 = vlaneseq
      %v2085 = vshrl.u32 %v2084, 7
      %v2086 = vsub.s32 1, %v2085
      %v2087 = vrot.slane %v2078, %v2086
      %v2088 = vlaneseq
      %v2089 = vshrl.u32 %v2088, 7
      %v2090 = vsub.s32 2, %v2089
      %v2091 = vrot.slane %v2078, %v2090
      %v2092 = vlaneseq
      %v2093 = vshrl.u32 %v2092, 7
      %v2094 = vsub.s32 3, %v2093
      %v2095 = vrot.slane %v2078, %v2094
      %v2096 = vlaneseq
      %v2097 = vshrl.u32 %v2096, 7
      %v2098 = vsub.s32 4, %v2097
      %v2099 = vrot.slane %v2078, %v2098
      %v2100 = vlaneseq
      %v2101 = vshrl.u32 %v2100, 7
      %v2102 = vsub.s32 5, %v2101
      %v2103 = vrot.slane %v2078, %v2102
      %v2104 = vlaneseq
      %v2105 = vshrl.u32 %v2104, 7
      %v2106 = vsub.s32 6, %v2105
      %v2107 = vrot.slane %v2078, %v2106
      %v2108 = vlaneseq
      %v2109 = vshrl.u32 %v2108, 7
      %v2110 = vsub.s32 7, %v2109
      %v2111 = vrot.slane %v2078, %v2110
      %v2120 = vadd.f32 %v2062, %v2083
      %v2121 = vadd.f32 %v2063, %v2087
      %v2122 = vadd.f32 %v2064, %v2091
      %v2123 = vadd.f32 %v2065, %v2095
      %v2124 = vadd.f32 %v2066, %v2099
      %v2125 = vadd.f32 %v2067, %v2103
      %v2126 = vadd.f32 %v2068, %v2107
      %v2127 = vadd.f32 %v2069, %v2111
      %v2128 = vadd.f32 %v2070, %v2083
      %v2129 = vadd.f32 %v2071, %v2087
      %v2130 = vadd.f32 %v2072, %v2091
      %v2131 = vadd.f32 %v2073, %v2095
      %v2132 = vadd.f32 %v2074, %v2099
      %v2133 = vadd.f32 %v2075, %v2103
      %v2134 = vadd.f32 %v2076, %v2107
      %v2135 = vadd.f32 %v2077, %v2111
      %v2136 = vmax.f32 %v2120, 0.0
      %v2137 = vmax.f32 %v2121, 0.0
      %v2138 = vmax.f32 %v2122, 0.0
      %v2139 = vmax.f32 %v2123, 0.0
      %v2140 = vmax.f32 %v2124, 0.0
      %v2141 = vmax.f32 %v2125, 0.0
      %v2142 = vmax.f32 %v2126, 0.0
      %v2143 = vmax.f32 %v2127, 0.0
      %v2144 = vmax.f32 %v2128, 0.0
      %v2145 = vmax.f32 %v2129, 0.0
      %v2146 = vmax.f32 %v2130, 0.0
      %v2147 = vmax.f32 %v2131, 0.0
      %v2148 = vmax.f32 %v2132, 0.0
      %v2149 = vmax.f32 %v2133, 0.0
      %v2150 = vmax.f32 %v2134, 0.0
      %v2151 = vmax.f32 %v2135, 0.0
      %v2152 = vpack.c.bf16 %v2144, %v2136
      %v2153 = vpack.c.bf16 %v2145, %v2137
      %v2154 = vpack.c.bf16 %v2146, %v2138
      %v2155 = vpack.c.bf16 %v2147, %v2139
      %v2156 = vpack.c.bf16 %v2148, %v2140
      %v2157 = vpack.c.bf16 %v2149, %v2141
      %v2158 = vpack.c.bf16 %v2150, %v2142
      %v2159 = vpack.c.bf16 %v2151, %v2143
      %v2160 = vld [vmem:[#allocation9] sm:$0xf]
      %v2161 = vld [vmem:[#allocation9 + $0x4] sm:$0xf]
      %v2162 = vld [vmem:[#allocation9 + $0x8] sm:$0xf]
      %v2163 = vld [vmem:[#allocation9 + $0xc] sm:$0xf]
      %v2164 = vld [vmem:[#allocation9 + $0x10] sm:$0xf]
      %v2165 = vld [vmem:[#allocation9 + $0x14] sm:$0xf]
      %v2166 = vld [vmem:[#allocation9 + $0x18] sm:$0xf]
      %v2167 = vld [vmem:[#allocation9 + $0x1c] sm:$0xf]
      %v2168 = vld [vmem:[#allocation9 + $0x20] sm:$0xf]
      %v2169 = vld [vmem:[#allocation9 + $0x24] sm:$0xf]
      %v2170 = vld [vmem:[#allocation9 + $0x28] sm:$0xf]
      %v2171 = vld [vmem:[#allocation9 + $0x2c] sm:$0xf]
      %v2172 = vld [vmem:[#allocation9 + $0x30] sm:$0xf]
      %v2173 = vld [vmem:[#allocation9 + $0x34] sm:$0xf]
      %v2174 = vld [vmem:[#allocation9 + $0x38] sm:$0xf]
      %v2175 = vld [vmem:[#allocation9 + $0x3c] sm:$0xf]
      %v2176 = vld [vmem:[#allocation9 + $0x40] sm:$0xf]
      %v2177 = vld [vmem:[#allocation9 + $0x44] sm:$0xf]
      %v2178 = vld [vmem:[#allocation9 + $0x48] sm:$0xf]
      %v2179 = vld [vmem:[#allocation9 + $0x4c] sm:$0xf]
      %v2180 = vld [vmem:[#allocation9 + $0x50] sm:$0xf]
      %v2181 = vld [vmem:[#allocation9 + $0x54] sm:$0xf]
      %v2182 = vld [vmem:[#allocation9 + $0x58] sm:$0xf]
      %v2183 = vld [vmem:[#allocation9 + $0x5c] sm:$0xf]
      %v2184 = vld [vmem:[#allocation9 + $0x60] sm:$0xf]
      %v2185 = vld [vmem:[#allocation9 + $0x64] sm:$0xf]
      %v2186 = vld [vmem:[#allocation9 + $0x68] sm:$0xf]
      %v2187 = vld [vmem:[#allocation9 + $0x6c] sm:$0xf]
      %v2188 = vld [vmem:[#allocation9 + $0x70] sm:$0xf]
      %v2189 = vld [vmem:[#allocation9 + $0x74] sm:$0xf]
      %v2190 = vld [vmem:[#allocation9 + $0x78] sm:$0xf]
      %v2191 = vld [vmem:[#allocation9 + $0x7c] sm:$0xf]
      %v2192 = vld [vmem:[#allocation9 + $0x80] sm:$0xf]
      %v2193 = vld [vmem:[#allocation9 + $0x84] sm:$0xf]
      %v2194 = vld [vmem:[#allocation9 + $0x88] sm:$0xf]
      %v2195 = vld [vmem:[#allocation9 + $0x8c] sm:$0xf]
      %v2196 = vld [vmem:[#allocation9 + $0x90] sm:$0xf]
      %v2197 = vld [vmem:[#allocation9 + $0x94] sm:$0xf]
      %v2198 = vld [vmem:[#allocation9 + $0x98] sm:$0xf]
      %v2199 = vld [vmem:[#allocation9 + $0x9c] sm:$0xf]
      %v2200 = vld [vmem:[#allocation9 + $0xa0] sm:$0xf]
      %v2201 = vld [vmem:[#allocation9 + $0xa4] sm:$0xf]
      %v2202 = vld [vmem:[#allocation9 + $0xa8] sm:$0xf]
      %v2203 = vld [vmem:[#allocation9 + $0xac] sm:$0xf]
      %v2204 = vld [vmem:[#allocation9 + $0xb0] sm:$0xf]
      %v2205 = vld [vmem:[#allocation9 + $0xb4] sm:$0xf]
      %v2206 = vld [vmem:[#allocation9 + $0xb8] sm:$0xf]
      %v2207 = vld [vmem:[#allocation9 + $0xbc] sm:$0xf]
      %v2208 = vld [vmem:[#allocation9 + $0xc0] sm:$0xf]
      %v2209 = vld [vmem:[#allocation9 + $0xc4] sm:$0xf]
      %v2210 = vld [vmem:[#allocation9 + $0xc8] sm:$0xf]
      %v2211 = vld [vmem:[#allocation9 + $0xcc] sm:$0xf]
      %v2212 = vld [vmem:[#allocation9 + $0xd0] sm:$0xf]
      %v2213 = vld [vmem:[#allocation9 + $0xd4] sm:$0xf]
      %v2214 = vld [vmem:[#allocation9 + $0xd8] sm:$0xf]
      %v2215 = vld [vmem:[#allocation9 + $0xdc] sm:$0xf]
      %v2216 = vld [vmem:[#allocation9 + $0xe0] sm:$0xf]
      %v2217 = vld [vmem:[#allocation9 + $0xe4] sm:$0xf]
      %v2218 = vld [vmem:[#allocation9 + $0xe8] sm:$0xf]
      %v2219 = vld [vmem:[#allocation9 + $0xec] sm:$0xf]
      %v2220 = vld [vmem:[#allocation9 + $0xf0] sm:$0xf]
      %v2221 = vld [vmem:[#allocation9 + $0xf4] sm:$0xf]
      %v2222 = vld [vmem:[#allocation9 + $0xf8] sm:$0xf]
      %v2223 = vld [vmem:[#allocation9 + $0xfc] sm:$0xf]
      %v2224 = vld [vmem:[#allocation9 + $0x100] sm:$0xf]
      %v2225 = vld [vmem:[#allocation9 + $0x104] sm:$0xf]
      %v2226 = vld [vmem:[#allocation9 + $0x108] sm:$0xf]
      %v2227 = vld [vmem:[#allocation9 + $0x10c] sm:$0xf]
      %v2228 = vld [vmem:[#allocation9 + $0x110] sm:$0xf]
      %v2229 = vld [vmem:[#allocation9 + $0x114] sm:$0xf]
      %v2230 = vld [vmem:[#allocation9 + $0x118] sm:$0xf]
      %v2231 = vld [vmem:[#allocation9 + $0x11c] sm:$0xf]
      %v2232 = vld [vmem:[#allocation9 + $0x120] sm:$0xf]
      %v2233 = vld [vmem:[#allocation9 + $0x124] sm:$0xf]
      %v2234 = vld [vmem:[#allocation9 + $0x128] sm:$0xf]
      %v2235 = vld [vmem:[#allocation9 + $0x12c] sm:$0xf]
      %v2236 = vld [vmem:[#allocation9 + $0x130] sm:$0xf]
      %v2237 = vld [vmem:[#allocation9 + $0x134] sm:$0xf]
      %v2238 = vld [vmem:[#allocation9 + $0x138] sm:$0xf]
      %v2239 = vld [vmem:[#allocation9 + $0x13c] sm:$0xf]
      %v2240 = vld [vmem:[#allocation9 + $0x140] sm:$0xf]
      %v2241 = vld [vmem:[#allocation9 + $0x144] sm:$0xf]
      %v2242 = vld [vmem:[#allocation9 + $0x148] sm:$0xf]
      %v2243 = vld [vmem:[#allocation9 + $0x14c] sm:$0xf]
      %v2244 = vld [vmem:[#allocation9 + $0x150] sm:$0xf]
      %v2245 = vld [vmem:[#allocation9 + $0x154] sm:$0xf]
      %v2246 = vld [vmem:[#allocation9 + $0x158] sm:$0xf]
      %v2247 = vld [vmem:[#allocation9 + $0x15c] sm:$0xf]
      %v2248 = vld [vmem:[#allocation9 + $0x160] sm:$0xf]
      %v2249 = vld [vmem:[#allocation9 + $0x164] sm:$0xf]
      %v2250 = vld [vmem:[#allocation9 + $0x168] sm:$0xf]
      %v2251 = vld [vmem:[#allocation9 + $0x16c] sm:$0xf]
      %v2252 = vld [vmem:[#allocation9 + $0x170] sm:$0xf]
      %v2253 = vld [vmem:[#allocation9 + $0x174] sm:$0xf]
      %v2254 = vld [vmem:[#allocation9 + $0x178] sm:$0xf]
      %v2255 = vld [vmem:[#allocation9 + $0x17c] sm:$0xf]
      %v2256 = vld [vmem:[#allocation9 + $0x180] sm:$0xf]
      %v2257 = vld [vmem:[#allocation9 + $0x184] sm:$0xf]
      %v2258 = vld [vmem:[#allocation9 + $0x188] sm:$0xf]
      %v2259 = vld [vmem:[#allocation9 + $0x18c] sm:$0xf]
      %v2260 = vld [vmem:[#allocation9 + $0x190] sm:$0xf]
      %v2261 = vld [vmem:[#allocation9 + $0x194] sm:$0xf]
      %v2262 = vld [vmem:[#allocation9 + $0x198] sm:$0xf]
      %v2263 = vld [vmem:[#allocation9 + $0x19c] sm:$0xf]
      %v2264 = vld [vmem:[#allocation9 + $0x1a0] sm:$0xf]
      %v2265 = vld [vmem:[#allocation9 + $0x1a4] sm:$0xf]
      %v2266 = vld [vmem:[#allocation9 + $0x1a8] sm:$0xf]
      %v2267 = vld [vmem:[#allocation9 + $0x1ac] sm:$0xf]
      %v2268 = vld [vmem:[#allocation9 + $0x1b0] sm:$0xf]
      %v2269 = vld [vmem:[#allocation9 + $0x1b4] sm:$0xf]
      %v2270 = vld [vmem:[#allocation9 + $0x1b8] sm:$0xf]
      %v2271 = vld [vmem:[#allocation9 + $0x1bc] sm:$0xf]
      %v2272 = vld [vmem:[#allocation9 + $0x1c0] sm:$0xf]
      %v2273 = vld [vmem:[#allocation9 + $0x1c4] sm:$0xf]
      %v2274 = vld [vmem:[#allocation9 + $0x1c8] sm:$0xf]
      %v2275 = vld [vmem:[#allocation9 + $0x1cc] sm:$0xf]
      %v2276 = vld [vmem:[#allocation9 + $0x1d0] sm:$0xf]
      %v2277 = vld [vmem:[#allocation9 + $0x1d4] sm:$0xf]
      %v2278 = vld [vmem:[#allocation9 + $0x1d8] sm:$0xf]
      %v2279 = vld [vmem:[#allocation9 + $0x1dc] sm:$0xf]
      %v2280 = vld [vmem:[#allocation9 + $0x1e0] sm:$0xf]
      %v2281 = vld [vmem:[#allocation9 + $0x1e4] sm:$0xf]
      %v2282 = vld [vmem:[#allocation9 + $0x1e8] sm:$0xf]
      %v2283 = vld [vmem:[#allocation9 + $0x1ec] sm:$0xf]
      %v2284 = vld [vmem:[#allocation9 + $0x1f0] sm:$0xf]
      %v2285 = vld [vmem:[#allocation9 + $0x1f4] sm:$0xf]
      %v2286 = vld [vmem:[#allocation9 + $0x1f8] sm:$0xf]
      %v2287 = vld [vmem:[#allocation9 + $0x1fc] sm:$0xf]
      %v2288 = vld [vmem:[%s4] sm:$0x1]
      %v2290 = vlaneseq
      %v2291 = vshrl.u32 %v2290, 7
      %v2292 = vsub.s32 0, %v2291
      %v2293 = vrot.slane %v2288, %v2292
      %v2423 = vunpack.c.l.b16 %v2160
      %v2424 = vunpack.c.l.b16 %v2161
      %v2425 = vunpack.c.l.b16 %v2162
      %v2426 = vunpack.c.l.b16 %v2163
      %v2427 = vunpack.c.l.b16 %v2164
      %v2428 = vunpack.c.l.b16 %v2165
      %v2429 = vunpack.c.l.b16 %v2166
      %v2430 = vunpack.c.l.b16 %v2167
      %v2431 = vunpack.c.l.b16 %v2168
      %v2432 = vunpack.c.l.b16 %v2169
      %v2433 = vunpack.c.l.b16 %v2170
      %v2434 = vunpack.c.l.b16 %v2171
      %v2435 = vunpack.c.l.b16 %v2172
      %v2436 = vunpack.c.l.b16 %v2173
      %v2437 = vunpack.c.l.b16 %v2174
      %v2438 = vunpack.c.l.b16 %v2175
      %v2439 = vunpack.c.l.b16 %v2176
      %v2440 = vunpack.c.l.b16 %v2177
      %v2441 = vunpack.c.l.b16 %v2178
      %v2442 = vunpack.c.l.b16 %v2179
      %v2443 = vunpack.c.l.b16 %v2180
      %v2444 = vunpack.c.l.b16 %v2181
      %v2445 = vunpack.c.l.b16 %v2182
      %v2446 = vunpack.c.l.b16 %v2183
      %v2447 = vunpack.c.l.b16 %v2184
      %v2448 = vunpack.c.l.b16 %v2185
      %v2449 = vunpack.c.l.b16 %v2186
      %v2450 = vunpack.c.l.b16 %v2187
      %v2451 = vunpack.c.l.b16 %v2188
      %v2452 = vunpack.c.l.b16 %v2189
      %v2453 = vunpack.c.l.b16 %v2190
      %v2454 = vunpack.c.l.b16 %v2191
      %v2455 = vunpack.c.l.b16 %v2192
      %v2456 = vunpack.c.l.b16 %v2193
      %v2457 = vunpack.c.l.b16 %v2194
      %v2458 = vunpack.c.l.b16 %v2195
      %v2459 = vunpack.c.l.b16 %v2196
      %v2460 = vunpack.c.l.b16 %v2197
      %v2461 = vunpack.c.l.b16 %v2198
      %v2462 = vunpack.c.l.b16 %v2199
      %v2463 = vunpack.c.l.b16 %v2200
      %v2464 = vunpack.c.l.b16 %v2201
      %v2465 = vunpack.c.l.b16 %v2202
      %v2466 = vunpack.c.l.b16 %v2203
      %v2467 = vunpack.c.l.b16 %v2204
      %v2468 = vunpack.c.l.b16 %v2205
      %v2469 = vunpack.c.l.b16 %v2206
      %v2470 = vunpack.c.l.b16 %v2207
      %v2471 = vunpack.c.l.b16 %v2208
      %v2472 = vunpack.c.l.b16 %v2209
      %v2473 = vunpack.c.l.b16 %v2210
      %v2474 = vunpack.c.l.b16 %v2211
      %v2475 = vunpack.c.l.b16 %v2212
      %v2476 = vunpack.c.l.b16 %v2213
      %v2477 = vunpack.c.l.b16 %v2214
      %v2478 = vunpack.c.l.b16 %v2215
      %v2479 = vunpack.c.l.b16 %v2216
      %v2480 = vunpack.c.l.b16 %v2217
      %v2481 = vunpack.c.l.b16 %v2218
      %v2482 = vunpack.c.l.b16 %v2219
      %v2483 = vunpack.c.l.b16 %v2220
      %v2484 = vunpack.c.l.b16 %v2221
      %v2485 = vunpack.c.l.b16 %v2222
      %v2486 = vunpack.c.l.b16 %v2223
      %v2487 = vunpack.c.l.b16 %v2224
      %v2488 = vunpack.c.l.b16 %v2225
      %v2489 = vunpack.c.l.b16 %v2226
      %v2490 = vunpack.c.l.b16 %v2227
      %v2491 = vunpack.c.l.b16 %v2228
      %v2492 = vunpack.c.l.b16 %v2229
      %v2493 = vunpack.c.l.b16 %v2230
      %v2494 = vunpack.c.l.b16 %v2231
      %v2495 = vunpack.c.l.b16 %v2232
      %v2496 = vunpack.c.l.b16 %v2233
      %v2497 = vunpack.c.l.b16 %v2234
      %v2498 = vunpack.c.l.b16 %v2235
      %v2499 = vunpack.c.l.b16 %v2236
      %v2500 = vunpack.c.l.b16 %v2237
      %v2501 = vunpack.c.l.b16 %v2238
      %v2502 = vunpack.c.l.b16 %v2239
      %v2503 = vunpack.c.l.b16 %v2240
      %v2504 = vunpack.c.l.b16 %v2241
      %v2505 = vunpack.c.l.b16 %v2242
      %v2506 = vunpack.c.l.b16 %v2243
      %v2507 = vunpack.c.l.b16 %v2244
      %v2508 = vunpack.c.l.b16 %v2245
      %v2509 = vunpack.c.l.b16 %v2246
      %v2510 = vunpack.c.l.b16 %v2247
      %v2511 = vunpack.c.l.b16 %v2248
      %v2512 = vunpack.c.l.b16 %v2249
      %v2513 = vunpack.c.l.b16 %v2250
      %v2514 = vunpack.c.l.b16 %v2251
      %v2515 = vunpack.c.l.b16 %v2252
      %v2516 = vunpack.c.l.b16 %v2253
      %v2517 = vunpack.c.l.b16 %v2254
      %v2518 = vunpack.c.l.b16 %v2255
      %v2519 = vunpack.c.l.b16 %v2256
      %v2520 = vunpack.c.l.b16 %v2257
      %v2521 = vunpack.c.l.b16 %v2258
      %v2522 = vunpack.c.l.b16 %v2259
      %v2523 = vunpack.c.l.b16 %v2260
      %v2524 = vunpack.c.l.b16 %v2261
      %v2525 = vunpack.c.l.b16 %v2262
      %v2526 = vunpack.c.l.b16 %v2263
      %v2527 = vunpack.c.l.b16 %v2264
      %v2528 = vunpack.c.l.b16 %v2265
      %v2529 = vunpack.c.l.b16 %v2266
      %v2530 = vunpack.c.l.b16 %v2267
      %v2531 = vunpack.c.l.b16 %v2268
      %v2532 = vunpack.c.l.b16 %v2269
      %v2533 = vunpack.c.l.b16 %v2270
      %v2534 = vunpack.c.l.b16 %v2271
      %v2535 = vunpack.c.l.b16 %v2272
      %v2536 = vunpack.c.l.b16 %v2273
      %v2537 = vunpack.c.l.b16 %v2274
      %v2538 = vunpack.c.l.b16 %v2275
      %v2539 = vunpack.c.l.b16 %v2276
      %v2540 = vunpack.c.l.b16 %v2277
      %v2541 = vunpack.c.l.b16 %v2278
      %v2542 = vunpack.c.l.b16 %v2279
      %v2543 = vunpack.c.l.b16 %v2280
      %v2544 = vunpack.c.l.b16 %v2281
      %v2545 = vunpack.c.l.b16 %v2282
      %v2546 = vunpack.c.l.b16 %v2283
      %v2547 = vunpack.c.l.b16 %v2284
      %v2548 = vunpack.c.l.b16 %v2285
      %v2549 = vunpack.c.l.b16 %v2286
      %v2550 = vunpack.c.l.b16 %v2287
      %v2551 = vpack.c.b16 %v2424, %v2423
      %v2552 = vpack.c.b16 %v2426, %v2425
      %v2553 = vpack.c.b16 %v2428, %v2427
      %v2554 = vpack.c.b16 %v2430, %v2429
      %v2555 = vpack.c.b16 %v2432, %v2431
      %v2556 = vpack.c.b16 %v2434, %v2433
      %v2557 = vpack.c.b16 %v2436, %v2435
      %v2558 = vpack.c.b16 %v2438, %v2437
      %v2559 = vpack.c.b16 %v2440, %v2439
      %v2560 = vpack.c.b16 %v2442, %v2441
      %v2561 = vpack.c.b16 %v2444, %v2443
      %v2562 = vpack.c.b16 %v2446, %v2445
      %v2563 = vpack.c.b16 %v2448, %v2447
      %v2564 = vpack.c.b16 %v2450, %v2449
      %v2565 = vpack.c.b16 %v2452, %v2451
      %v2566 = vpack.c.b16 %v2454, %v2453
      %v2567 = vpack.c.b16 %v2456, %v2455
      %v2568 = vpack.c.b16 %v2458, %v2457
      %v2569 = vpack.c.b16 %v2460, %v2459
      %v2570 = vpack.c.b16 %v2462, %v2461
      %v2571 = vpack.c.b16 %v2464, %v2463
      %v2572 = vpack.c.b16 %v2466, %v2465
      %v2573 = vpack.c.b16 %v2468, %v2467
      %v2574 = vpack.c.b16 %v2470, %v2469
      %v2575 = vpack.c.b16 %v2472, %v2471
      %v2576 = vpack.c.b16 %v2474, %v2473
      %v2577 = vpack.c.b16 %v2476, %v2475
      %v2578 = vpack.c.b16 %v2478, %v2477
      %v2579 = vpack.c.b16 %v2480, %v2479
      %v2580 = vpack.c.b16 %v2482, %v2481
      %v2581 = vpack.c.b16 %v2484, %v2483
      %v2582 = vpack.c.b16 %v2486, %v2485
      %v2583 = vpack.c.b16 %v2488, %v2487
      %v2584 = vpack.c.b16 %v2490, %v2489
      %v2585 = vpack.c.b16 %v2492, %v2491
      %v2586 = vpack.c.b16 %v2494, %v2493
      %v2587 = vpack.c.b16 %v2496, %v2495
      %v2588 = vpack.c.b16 %v2498, %v2497
      %v2589 = vpack.c.b16 %v2500, %v2499
      %v2590 = vpack.c.b16 %v2502, %v2501
      %v2591 = vpack.c.b16 %v2504, %v2503
      %v2592 = vpack.c.b16 %v2506, %v2505
      %v2593 = vpack.c.b16 %v2508, %v2507
      %v2594 = vpack.c.b16 %v2510, %v2509
      %v2595 = vpack.c.b16 %v2512, %v2511
      %v2596 = vpack.c.b16 %v2514, %v2513
      %v2597 = vpack.c.b16 %v2516, %v2515
      %v2598 = vpack.c.b16 %v2518, %v2517
      %v2599 = vpack.c.b16 %v2520, %v2519
      %v2600 = vpack.c.b16 %v2522, %v2521
      %v2601 = vpack.c.b16 %v2524, %v2523
      %v2602 = vpack.c.b16 %v2526, %v2525
      %v2603 = vpack.c.b16 %v2528, %v2527
      %v2604 = vpack.c.b16 %v2530, %v2529
      %v2605 = vpack.c.b16 %v2532, %v2531
      %v2606 = vpack.c.b16 %v2534, %v2533
      %v2607 = vpack.c.b16 %v2536, %v2535
      %v2608 = vpack.c.b16 %v2538, %v2537
      %v2609 = vpack.c.b16 %v2540, %v2539
      %v2610 = vpack.c.b16 %v2542, %v2541
      %v2611 = vpack.c.b16 %v2544, %v2543
      %v2612 = vpack.c.b16 %v2546, %v2545
      %v2613 = vpack.c.b16 %v2548, %v2547
      %v2614 = vpack.c.b16 %v2550, %v2549
      %2679 = vmatprep.subr.bf16.mxu0 0
      %2680 = vmatpush1.bf16.msra.mxu0 %v2558
      %2681 = vmatprep.subr.bf16.mxu0 0
      %2682 = vmatpush1.bf16.msra.mxu0 %v2557
      %2683 = vmatprep.subr.bf16.mxu0 0
      %2684 = vmatpush1.bf16.msra.mxu0 %v2556
      %2685 = vmatprep.subr.bf16.mxu0 0
      %2686 = vmatpush1.bf16.msra.mxu0 %v2555
      %2687 = vmatprep.subr.bf16.mxu0 0
      %2688 = vmatpush1.bf16.msra.mxu0 %v2554
      %2689 = vmatprep.subr.bf16.mxu0 0
      %2690 = vmatpush1.bf16.msra.mxu0 %v2553
      %2691 = vmatprep.subr.bf16.mxu0 0
      %2692 = vmatpush1.bf16.msra.mxu0 %v2552
      %2693 = vmatprep.subr.bf16.mxu0 0
      %2694 = vmatpush1.bf16.msra.mxu0 %v2551
      %2695 = vmatprep.subr.bf16.mxu0 0
      %2696 = vmatpush2.bf16.msra.mxu0 %v2566
      %2697 = vmatprep.subr.bf16.mxu0 0
      %2698 = vmatpush2.bf16.msra.mxu0 %v2565
      %2699 = vmatprep.subr.bf16.mxu0 0
      %2700 = vmatpush2.bf16.msra.mxu0 %v2564
      %2701 = vmatprep.subr.bf16.mxu0 0
      %2702 = vmatpush2.bf16.msra.mxu0 %v2563
      %2703 = vmatprep.subr.bf16.mxu0 0
      %2704 = vmatpush2.bf16.msra.mxu0 %v2562
      %2705 = vmatprep.subr.bf16.mxu0 0
      %2706 = vmatpush2.bf16.msra.mxu0 %v2561
      %2707 = vmatprep.subr.bf16.mxu0 0
      %2708 = vmatpush2.bf16.msra.mxu0 %v2560
      %2709 = vmatprep.subr.bf16.mxu0 0
      %2710 = vmatpush2.bf16.msra.mxu0 %v2559
      %2711 = vmatprep.mubr.bf16.mxu0 %v2153
      %2712 = vmatmul.mubr.bf16.gmra.mxu0 %v2152
      %v2713 = vpop.f32.mrf.mxu0
      %v2714 = vadd.f32 %v2293, %v2713
      %v2715 = vpop.f32.mrf.mxu0
      %v2716 = vpop.f32.mrf.mxu0
      %v2717 = vadd.f32 %v2293, %v2716
      %v2718 = vpop.f32.mrf.mxu0
      %2719 = vdwg.mxu0
      %2720 = vmatprep.subr.bf16.mxu0 0
      %2721 = vmatpush1.bf16.msra.mxu0 %v2574
      %2722 = vmatprep.subr.bf16.mxu0 0
      %2723 = vmatpush1.bf16.msra.mxu0 %v2573
      %2724 = vmatprep.subr.bf16.mxu0 0
      %2725 = vmatpush1.bf16.msra.mxu0 %v2572
      %2726 = vmatprep.subr.bf16.mxu0 0
      %2727 = vmatpush1.bf16.msra.mxu0 %v2571
      %2728 = vmatprep.subr.bf16.mxu0 0
      %2729 = vmatpush1.bf16.msra.mxu0 %v2570
      %2730 = vmatprep.subr.bf16.mxu0 0
      %2731 = vmatpush1.bf16.msra.mxu0 %v2569
      %2732 = vmatprep.subr.bf16.mxu0 0
      %2733 = vmatpush1.bf16.msra.mxu0 %v2568
      %2734 = vmatprep.subr.bf16.mxu0 0
      %2735 = vmatpush1.bf16.msra.mxu0 %v2567
      %2736 = vmatprep.subr.bf16.mxu0 0
      %2737 = vmatpush2.bf16.msra.mxu0 %v2582
      %2738 = vmatprep.subr.bf16.mxu0 0
      %2739 = vmatpush2.bf16.msra.mxu0 %v2581
      %2740 = vmatprep.subr.bf16.mxu0 0
      %2741 = vmatpush2.bf16.msra.mxu0 %v2580
      %2742 = vmatprep.subr.bf16.mxu0 0
      %2743 = vmatpush2.bf16.msra.mxu0 %v2579
      %2744 = vmatprep.subr.bf16.mxu0 0
      %2745 = vmatpush2.bf16.msra.mxu0 %v2578
      %2746 = vmatprep.subr.bf16.mxu0 0
      %2747 = vmatpush2.bf16.msra.mxu0 %v2577
      %2748 = vmatprep.subr.bf16.mxu0 0
      %2749 = vmatpush2.bf16.msra.mxu0 %v2576
      %2750 = vmatprep.subr.bf16.mxu0 0
      %2751 = vmatpush2.bf16.msra.mxu0 %v2575
      %2752 = vmatprep.mubr.bf16.mxu0 %v2155
      %2753 = vmatmul.mubr.bf16.gmra.mxu0 %v2154
      %v2754 = vpop.f32.mrf.mxu0
      %v2755 = vadd.f32 %v2714, %v2754
      %v2756 = vpop.f32.mrf.mxu0
      %v2757 = vpop.f32.mrf.mxu0
      %v2758 = vadd.f32 %v2717, %v2757
      %v2759 = vpop.f32.mrf.mxu0
      %2760 = vdwg.mxu0
      %2761 = vmatprep.subr.bf16.mxu0 0
      %2762 = vmatpush1.bf16.msra.mxu0 %v2590
      %2763 = vmatprep.subr.bf16.mxu0 0
      %2764 = vmatpush1.bf16.msra.mxu0 %v2589
      %2765 = vmatprep.subr.bf16.mxu0 0
      %2766 = vmatpush1.bf16.msra.mxu0 %v2588
      %2767 = vmatprep.subr.bf16.mxu0 0
      %2768 = vmatpush1.bf16.msra.mxu0 %v2587
      %2769 = vmatprep.subr.bf16.mxu0 0
      %2770 = vmatpush1.bf16.msra.mxu0 %v2586
      %2771 = vmatprep.subr.bf16.mxu0 0
      %2772 = vmatpush1.bf16.msra.mxu0 %v2585
      %2773 = vmatprep.subr.bf16.mxu0 0
      %2774 = vmatpush1.bf16.msra.mxu0 %v2584
      %2775 = vmatprep.subr.bf16.mxu0 0
      %2776 = vmatpush1.bf16.msra.mxu0 %v2583
      %2777 = vmatprep.subr.bf16.mxu0 0
      %2778 = vmatpush2.bf16.msra.mxu0 %v2598
      %2779 = vmatprep.subr.bf16.mxu0 0
      %2780 = vmatpush2.bf16.msra.mxu0 %v2597
      %2781 = vmatprep.subr.bf16.mxu0 0
      %2782 = vmatpush2.bf16.msra.mxu0 %v2596
      %2783 = vmatprep.subr.bf16.mxu0 0
      %2784 = vmatpush2.bf16.msra.mxu0 %v2595
      %2785 = vmatprep.subr.bf16.mxu0 0
      %2786 = vmatpush2.bf16.msra.mxu0 %v2594
      %2787 = vmatprep.subr.bf16.mxu0 0
      %2788 = vmatpush2.bf16.msra.mxu0 %v2593
      %2789 = vmatprep.subr.bf16.mxu0 0
      %2790 = vmatpush2.bf16.msra.mxu0 %v2592
      %2791 = vmatprep.subr.bf16.mxu0 0
      %2792 = vmatpush2.bf16.msra.mxu0 %v2591
      %2793 = vmatprep.mubr.bf16.mxu0 %v2157
      %2794 = vmatmul.mubr.bf16.gmra.mxu0 %v2156
      %v2795 = vpop.f32.mrf.mxu0
      %v2796 = vadd.f32 %v2755, %v2795
      %v2797 = vpop.f32.mrf.mxu0
      %v2798 = vpop.f32.mrf.mxu0
      %v2799 = vadd.f32 %v2758, %v2798
      %v2800 = vpop.f32.mrf.mxu0
      %2801 = vdwg.mxu0
      %2802 = vmatprep.subr.bf16.mxu0 0
      %2803 = vmatpush1.bf16.msra.mxu0 %v2606
      %2804 = vmatprep.subr.bf16.mxu0 0
      %2805 = vmatpush1.bf16.msra.mxu0 %v2605
      %2806 = vmatprep.subr.bf16.mxu0 0
      %2807 = vmatpush1.bf16.msra.mxu0 %v2604
      %2808 = vmatprep.subr.bf16.mxu0 0
      %2809 = vmatpush1.bf16.msra.mxu0 %v2603
      %2810 = vmatprep.subr.bf16.mxu0 0
      %2811 = vmatpush1.bf16.msra.mxu0 %v2602
      %2812 = vmatprep.subr.bf16.mxu0 0
      %2813 = vmatpush1.bf16.msra.mxu0 %v2601
      %2814 = vmatprep.subr.bf16.mxu0 0
      %2815 = vmatpush1.bf16.msra.mxu0 %v2600
      %2816 = vmatprep.subr.bf16.mxu0 0
      %2817 = vmatpush1.bf16.msra.mxu0 %v2599
      %2818 = vmatprep.subr.bf16.mxu0 0
      %2819 = vmatpush2.bf16.msra.mxu0 %v2614
      %2820 = vmatprep.subr.bf16.mxu0 0
      %2821 = vmatpush2.bf16.msra.mxu0 %v2613
      %2822 = vmatprep.subr.bf16.mxu0 0
      %2823 = vmatpush2.bf16.msra.mxu0 %v2612
      %2824 = vmatprep.subr.bf16.mxu0 0
      %2825 = vmatpush2.bf16.msra.mxu0 %v2611
      %2826 = vmatprep.subr.bf16.mxu0 0
      %2827 = vmatpush2.bf16.msra.mxu0 %v2610
      %2828 = vmatprep.subr.bf16.mxu0 0
      %2829 = vmatpush2.bf16.msra.mxu0 %v2609
      %2830 = vmatprep.subr.bf16.mxu0 0
      %2831 = vmatpush2.bf16.msra.mxu0 %v2608
      %2832 = vmatprep.subr.bf16.mxu0 0
      %2833 = vmatpush2.bf16.msra.mxu0 %v2607
      %2834 = vmatprep.mubr.bf16.mxu0 %v2159
      %2835 = vmatmul.mubr.bf16.gmra.mxu0 %v2158
      %v2836 = vpop.f32.mrf.mxu0
      %v2837 = vadd.f32 %v2796, %v2836
      %v2838 = vpop.f32.mrf.mxu0
      %v2839 = vpop.f32.mrf.mxu0
      %v2840 = vadd.f32 %v2799, %v2839
      %v2841 = vpop.f32.mrf.mxu0
      %2842 = vdwg.mxu0
      %2843 = vst [vmem:[#allocation11] sm:$0xff] %v2837
      %2844 = vst [vmem:[#allocation11 + $0x8] sm:$0xff] %v2840
    $region49: #{_scsmd_forward_impl.1} parent=1 // pred_fallthru
      _
    // Predicated region
    $region50: #{_scsmd_forward_impl.1} parent=1 // pred_check
      _
    $region51: #{_scsmd_forward_impl.1} parent=1 // pred_check_branch
      %2846 = sbr.rel (0) target = $region53
    $region52: #{_scsmd_forward_impl.1} parent=1 // pred_region
      %s2848 = ssub.s32 256, 128
      %2849 = vsyncadd [#allocation5], %s2848
      %s2850 = sshll.u32 [#allocation11], 4
      %s2851 = int_to_ptr.vmem [resolvable:$true] %s2850
      %2856 = dma.vmem_to_hbm [thread:$0]  %s2851, 128, %s5, [#allocation5], 128, 128, 8
    $region53: #{_scsmd_forward_impl.1} parent=1 // pred_fallthru
      _
    // Predicated region
    $region54: #{_scsmd_forward_impl.1} parent=1 // pred_check
      _
    $region55: #{_scsmd_forward_impl.1} parent=1 // pred_check_branch
      %2858 = sbr.rel (0) target = $region57
    $region56: #{_scsmd_forward_impl.1} parent=1 // pred_region
      %2859 = dma.done [#allocation5], 256
    $region57: #{_scsmd_forward_impl.1} parent=1 // pred_fallthru
      _
    %2860 = vsyncpa [#allocation4], 1
    %2861 = vsyncpa [#allocation7], 1
    %2862 = vsyncpa [#allocation10], 1
    %2863 = vsyncpa [#allocation5], 1

</llo_original>
